<compile_context>
chip_gen: v7x
topology: tpu7x:2x2x1
jax: 0.10.0
libtpu: 0.0.40
codegen_flags: <defaults>
</compile_context>

<pallas_src>
import jax
import jax.numpy as jnp
from jax.experimental import pallas as pl
from jax.experimental.pallas import tpu as pltpu


def feature_extractor_kernel(x_ref, wp_ref, bp_ref, wih_ref, whh_ref,
                             bin_ref, bhn_ref, out_ref):
    # x_ref:   (T, N, C)     time-major input (f32)
    # wp_ref:  (C, P)        projection weight (f32)
    # bp_ref:  (1, P)        projection bias (f32)
    # wih_ref: (P, 3*GP)     fused input->gate weights, gate order [r|z|n],
    #                        each gate zero-padded H->GP=128 lanes (bf16)
    # whh_ref: (GP, 3*GP)    fused hidden->gate weights, rows and per-gate cols
    #                        zero-padded to 128 (bf16)
    # bin_ref: (1, 3*GP)     fused bias [bih_r+bhh_r | bih_z+bhh_z | bih_n] (f32)
    # bhn_ref: (1, GP)       bhh_n, zero-padded (f32, stays inside r*(...))
    # out_ref: (N, H)        h_T (last time-step hidden state)
    T, N, C = x_ref.shape
    H = out_ref.shape[1]
    GP = bhn_ref.shape[1]          # 128: lane-aligned per-gate width
    G3 = wih_ref.shape[1]          # 3 * GP

    # --- Linear(C -> P) + LeakyReLU(0.01) + input-gate precompute ------------
    x = x_ref[...].reshape(T * N, C)
    v = jnp.dot(x, wp_ref[...], preferred_element_type=jnp.float32) + bp_ref[...]
    proj = jnp.maximum(v, 0.01 * v)                       # LeakyReLU, one vmax
    gx_all = (jnp.dot(proj.astype(jnp.bfloat16), wih_ref[...],
                      preferred_element_type=jnp.float32)
              + bin_ref[...]).reshape(T, N, G3)           # (T, N, 3*GP), f32

    # Hoisted out of the serial loop (loaded/broadcast once, reused T times).
    whh = whh_ref[...]                                    # (GP, 3*GP) bf16
    bhn = jnp.broadcast_to(bhn_ref[...], (N, GP))         # (N, GP) f32

    def sigmoid(u):
        # EUP-only sigmoid: avoids the full-precision divide on the VPU.
        return 0.5 * jnp.tanh(0.5 * u) + 0.5

    # --- GRU recurrence (PyTorch gate equations), one fused matmul / step ----
    # Fully unrolled (T static); each step is strictly serial in h.
    h = jnp.zeros((N, GP), jnp.float32)                   # padded lanes stay 0
    for t in range(T):
        gx = gx_all[t]                                    # (N, 3*GP), static idx
        gh = jnp.dot(h.astype(jnp.bfloat16), whh,
                     preferred_element_type=jnp.float32)  # (N, 3*GP)
        r = sigmoid(gx[:, 0:GP] + gh[:, 0:GP])            # vreg-aligned slices
        z = sigmoid(gx[:, GP:2 * GP] + gh[:, GP:2 * GP])
        n = jnp.tanh(gx[:, 2 * GP:] + r * (gh[:, 2 * GP:] + bhn))
        h = (1.0 - z) * n + z * h

    out_ref[...] = h[:, :H]


@jax.jit
def feature_extractor(x, wp, bp, wih, whh, bih, bhh):
    B, Ns, T, C = x.shape
    N = B * Ns
    P = wp.shape[1]
    H = whh.shape[-1]
    GP = 128                      # lane-aligned per-gate width
    G3 = 3 * GP

    # Glue: flatten (B, Ns) -> N and go time-major so each step reads a
    # contiguous (N, .) slab.  Negligible at these shapes.
    # TODO(synk): at production N fold this transpose into the BlockSpec index_map.
    xt = jnp.transpose(x.reshape(N, T, C), (1, 0, 2)).astype(jnp.float32)

    def pad_cols(a):              # zero-pad last dim H -> GP
        return jnp.pad(a, ((0, 0), (0, GP - a.shape[1])))

    # Fuse gate weights/biases along the output axis, gate order [r | z | n],
    # each gate padded to a 128-lane column block.
    wih_cat = jnp.concatenate(
        [pad_cols(wih[0]), pad_cols(wih[1]), pad_cols(wih[2])], axis=1)   # (P, 3GP)
    whh_cat = jnp.concatenate(
        [pad_cols(whh[0]), pad_cols(whh[1]), pad_cols(whh[2])], axis=1)   # (H, 3GP)
    whh_cat = jnp.pad(whh_cat, ((0, GP - H), (0, 0)))                     # (GP, 3GP)
    b_in = jnp.concatenate(
        [pad_cols(bih[0] + bhh[0]), pad_cols(bih[1] + bhh[1]),
         pad_cols(bih[2])], axis=1)                                       # (1, 3GP)
    bhn = pad_cols(bhh[2])                                                # (1, GP)

    out = pl.pallas_call(
        feature_extractor_kernel,
        out_shape=jax.ShapeDtypeStruct((N, H), jnp.float32),
        grid=(1,),
        in_specs=[
            pl.BlockSpec((T, N, C), lambda i: (0, 0, 0)),
            pl.BlockSpec((C, P), lambda i: (0, 0)),
            pl.BlockSpec((1, P), lambda i: (0, 0)),
            pl.BlockSpec((P, G3), lambda i: (0, 0)),
            pl.BlockSpec((GP, G3), lambda i: (0, 0)),
            pl.BlockSpec((1, G3), lambda i: (0, 0)),
            pl.BlockSpec((1, GP), lambda i: (0, 0)),
        ],
        out_specs=pl.BlockSpec((N, H), lambda i: (0, 0)),
    )(xt,
      wp.astype(jnp.float32), bp.astype(jnp.float32),
      wih_cat.astype(jnp.bfloat16), whh_cat.astype(jnp.bfloat16),
      b_in.astype(jnp.float32), bhn.astype(jnp.float32))
    return out.reshape(B, Ns, H)


def reference(x, wp, bp, wih, whh, bih, bhh):
    """Pure-JAX reference mirroring the PyTorch forward pass (all f32)."""
    B, Ns, T, C = x.shape
    v = jnp.einsum('bntc,cp->bntp', x, wp) + bp
    proj = jnp.where(v >= 0.0, v, 0.01 * v)
    seq = proj.reshape(B * Ns, T, -1)
    H = whh.shape[-1]
    h = jnp.zeros((B * Ns, H), jnp.float32)
    for t in range(T):
        xt = seq[:, t]
        r = jax.nn.sigmoid(xt @ wih[0] + bih[0] + h @ whh[0] + bhh[0])
        z = jax.nn.sigmoid(xt @ wih[1] + bih[1] + h @ whh[1] + bhh[1])
        n = jnp.tanh(xt @ wih[2] + bih[2] + r * (h @ whh[2] + bhh[2]))
        h = (1.0 - z) * n + z * h
    return h.reshape(B, Ns, H)


if __name__ == "__main__":
    # Small shapes consistent with the module: C = 25 (fixed by nn.Linear(25, P)),
    # proj_dim P = 20, GRU hidden H = 25.
    B, Ns, T, C = 2, 4, 8, 25
    P, H = 20, 25

    key = jax.random.PRNGKey(0)
    kx, kwp, kbp, kwih, kwhh, kbih, kbhh = jax.random.split(key, 7)

    x = jax.random.normal(kx, (B, Ns, T, C), jnp.float32)

    # Deterministic synthetic parameters (PyTorch-style uniform init ranges).
    s_lin = 1.0 / jnp.sqrt(C)
    s_gru = 1.0 / jnp.sqrt(H)
    wp = jax.random.uniform(kwp, (C, P), jnp.float32, -s_lin, s_lin)
    bp = jax.random.uniform(kbp, (1, P), jnp.float32, -s_lin, s_lin)
    wih = jax.random.uniform(kwih, (3, P, H), jnp.float32, -s_gru, s_gru)
    whh = jax.random.uniform(kwhh, (3, H, H), jnp.float32, -s_gru, s_gru)
    bih = jax.random.uniform(kbih, (3, 1, H), jnp.float32, -s_gru, s_gru)
    bhh = jax.random.uniform(kbhh, (3, 1, H), jnp.float32, -s_gru, s_gru)

    out = feature_extractor(x, wp, bp, wih, whh, bih, bhh)
    out = jax.block_until_ready(out)

    ref = reference(x, wp, bp, wih, whh, bih, bhh)
    assert out.shape == (B, Ns, H)
    assert jnp.allclose(out, ref, atol=1e-2, rtol=1e-2)

    print("KERNEL_OK")
</pallas_src>

<mosaic_0001>
module attributes {stable_mosaic.version = 11 : i64} {
  func.func @feature_extractor_kernel(%arg0: i32, %arg1: memref<8x8x25xf32, #tpu.memory_space<vmem>>, %arg2: memref<25x20xf32, #tpu.memory_space<vmem>>, %arg3: memref<1x20xf32, #tpu.memory_space<vmem>>, %arg4: memref<20x384xbf16, #tpu.memory_space<vmem>>, %arg5: memref<128x384xbf16, #tpu.memory_space<vmem>>, %arg6: memref<1x384xf32, #tpu.memory_space<vmem>>, %arg7: memref<1x128xf32, #tpu.memory_space<vmem>>, %arg8: memref<8x25xf32, #tpu.memory_space<vmem>>) attributes {dimension_semantics = [#tpu.dimension_semantics<arbitrary>], iteration_bounds = array<i64: 1>, scalar_prefetch = 0 : i64, scratch_operands = 0 : i64, tpu.core_type = #tpu.core_type<tc>, window_params = [{pipeline_mode = #tpu.pipeline_mode<synchronous>, transform_indices = @transform_0, window_bounds = array<i64: 8, 8, 25>}, {pipeline_mode = #tpu.pipeline_mode<synchronous>, transform_indices = @transform_1, window_bounds = array<i64: 25, 20>}, {pipeline_mode = #tpu.pipeline_mode<synchronous>, transform_indices = @transform_2, window_bounds = array<i64: 1, 20>}, {pipeline_mode = #tpu.pipeline_mode<synchronous>, transform_indices = @transform_3, window_bounds = array<i64: 20, 384>}, {pipeline_mode = #tpu.pipeline_mode<synchronous>, transform_indices = @transform_4, window_bounds = array<i64: 128, 384>}, {pipeline_mode = #tpu.pipeline_mode<synchronous>, transform_indices = @transform_5, window_bounds = array<i64: 1, 384>}, {pipeline_mode = #tpu.pipeline_mode<synchronous>, transform_indices = @transform_6, window_bounds = array<i64: 1, 128>}, {pipeline_mode = #tpu.pipeline_mode<synchronous>, transform_indices = @transform_7, window_bounds = array<i64: 8, 25>}]} {
    %c0 = arith.constant 0 : index
    %c0_0 = arith.constant 0 : index
    %c0_1 = arith.constant 0 : index
    %0 = vector.load %arg1[%c0, %c0_0, %c0_1] : memref<8x8x25xf32, #tpu.memory_space<vmem>>, vector<8x8x25xf32>
    %1 = vector.shape_cast %0 : vector<8x8x25xf32> to vector<64x25xf32>
    %c0_2 = arith.constant 0 : index
    %c0_3 = arith.constant 0 : index
    %2 = vector.load %arg2[%c0_2, %c0_3] : memref<25x20xf32, #tpu.memory_space<vmem>>, vector<25x20xf32>
    %cst = arith.constant dense<0.000000e+00> : vector<64x20xf32>
    %3 = tpu.matmul %1, %2, %cst {dimension_numbers = #tpu.dot_dimension_numbers<[1], [0], [0], [1], [0, 0, 1, 1], [], []>} : vector<64x25xf32>, vector<25x20xf32>, vector<64x20xf32> -> vector<64x20xf32>
    %c0_4 = arith.constant 0 : index
    %c0_5 = arith.constant 0 : index
    %4 = vector.load %arg3[%c0_4, %c0_5] : memref<1x20xf32, #tpu.memory_space<vmem>>, vector<1x20xf32>
    %5 = vector.broadcast %4 : vector<1x20xf32> to vector<64x20xf32>
    %6 = arith.addf %3, %5 : vector<64x20xf32>
    %cst_6 = arith.constant 0.00999999977 : f32
    %7 = vector.broadcast %cst_6 : f32 to vector<64x20xf32>
    %8 = arith.mulf %7, %6 : vector<64x20xf32>
    %9 = arith.maximumf %6, %8 : vector<64x20xf32>
    %10 = arith.truncf %9 : vector<64x20xf32> to vector<64x20xbf16>
    %c0_7 = arith.constant 0 : index
    %c0_8 = arith.constant 0 : index
    %11 = vector.load %arg4[%c0_7, %c0_8] : memref<20x384xbf16, #tpu.memory_space<vmem>>, vector<20x384xbf16>
    %cst_9 = arith.constant dense<0.000000e+00> : vector<64x384xf32>
    %12 = tpu.matmul %10, %11, %cst_9 {dimension_numbers = #tpu.dot_dimension_numbers<[1], [0], [0], [1], [0, 0, 1, 1], [], []>} : vector<64x20xbf16>, vector<20x384xbf16>, vector<64x384xf32> -> vector<64x384xf32>
    %c0_10 = arith.constant 0 : index
    %c0_11 = arith.constant 0 : index
    %13 = vector.load %arg6[%c0_10, %c0_11] : memref<1x384xf32, #tpu.memory_space<vmem>>, vector<1x384xf32>
    %14 = vector.broadcast %13 : vector<1x384xf32> to vector<64x384xf32>
    %15 = arith.addf %12, %14 : vector<64x384xf32>
    %16 = vector.shape_cast %15 : vector<64x384xf32> to vector<8x8x384xf32>
    %c0_12 = arith.constant 0 : index
    %c0_13 = arith.constant 0 : index
    %17 = vector.load %arg5[%c0_12, %c0_13] : memref<128x384xbf16, #tpu.memory_space<vmem>>, vector<128x384xbf16>
    %c0_14 = arith.constant 0 : index
    %c0_15 = arith.constant 0 : index
    %18 = vector.load %arg7[%c0_14, %c0_15] : memref<1x128xf32, #tpu.memory_space<vmem>>, vector<1x128xf32>
    %19 = vector.shape_cast %18 : vector<1x128xf32> to vector<1x128xf32>
    %20 = vector.broadcast %19 : vector<1x128xf32> to vector<8x128xf32>
    %cst_16 = arith.constant 0.000000e+00 : f32
    %21 = vector.broadcast %cst_16 : f32 to vector<8x128xf32>
    %22 = vector.extract_strided_slice %16 {offsets = [0, 0, 0], sizes = [1, 8, 384], strides = [1, 1, 1]} : vector<8x8x384xf32> to vector<1x8x384xf32>
    %23 = vector.shape_cast %22 : vector<1x8x384xf32> to vector<8x384xf32>
    %24 = arith.truncf %21 : vector<8x128xf32> to vector<8x128xbf16>
    %cst_17 = arith.constant dense<0.000000e+00> : vector<8x384xf32>
    %25 = tpu.matmul %24, %17, %cst_17 {dimension_numbers = #tpu.dot_dimension_numbers<[1], [0], [0], [1], [0, 0, 1, 1], [], []>} : vector<8x128xbf16>, vector<128x384xbf16>, vector<8x384xf32> -> vector<8x384xf32>
    %26 = vector.extract_strided_slice %23 {offsets = [0, 0], sizes = [8, 128], strides = [1, 1]} : vector<8x384xf32> to vector<8x128xf32>
    %27 = vector.extract_strided_slice %25 {offsets = [0, 0], sizes = [8, 128], strides = [1, 1]} : vector<8x384xf32> to vector<8x128xf32>
    %28 = arith.addf %26, %27 : vector<8x128xf32>
    %cst_18 = arith.constant 5.000000e-01 : f32
    %29 = vector.broadcast %cst_18 : f32 to vector<8x128xf32>
    %30 = arith.mulf %29, %28 : vector<8x128xf32>
    %31 = math.tanh %30 : vector<8x128xf32>
    %cst_19 = arith.constant 5.000000e-01 : f32
    %32 = vector.broadcast %cst_19 : f32 to vector<8x128xf32>
    %33 = arith.mulf %32, %31 : vector<8x128xf32>
    %cst_20 = arith.constant 5.000000e-01 : f32
    %34 = vector.broadcast %cst_20 : f32 to vector<8x128xf32>
    %35 = arith.addf %33, %34 : vector<8x128xf32>
    %36 = vector.extract_strided_slice %23 {offsets = [0, 128], sizes = [8, 128], strides = [1, 1]} : vector<8x384xf32> to vector<8x128xf32>
    %37 = vector.extract_strided_slice %25 {offsets = [0, 128], sizes = [8, 128], strides = [1, 1]} : vector<8x384xf32> to vector<8x128xf32>
    %38 = arith.addf %36, %37 : vector<8x128xf32>
    %cst_21 = arith.constant 5.000000e-01 : f32
    %39 = vector.broadcast %cst_21 : f32 to vector<8x128xf32>
    %40 = arith.mulf %39, %38 : vector<8x128xf32>
    %41 = math.tanh %40 : vector<8x128xf32>
    %cst_22 = arith.constant 5.000000e-01 : f32
    %42 = vector.broadcast %cst_22 : f32 to vector<8x128xf32>
    %43 = arith.mulf %42, %41 : vector<8x128xf32>
    %cst_23 = arith.constant 5.000000e-01 : f32
    %44 = vector.broadcast %cst_23 : f32 to vector<8x128xf32>
    %45 = arith.addf %43, %44 : vector<8x128xf32>
    %46 = vector.extract_strided_slice %23 {offsets = [0, 256], sizes = [8, 128], strides = [1, 1]} : vector<8x384xf32> to vector<8x128xf32>
    %47 = vector.extract_strided_slice %25 {offsets = [0, 256], sizes = [8, 128], strides = [1, 1]} : vector<8x384xf32> to vector<8x128xf32>
    %48 = arith.addf %47, %20 : vector<8x128xf32>
    %49 = arith.mulf %35, %48 : vector<8x128xf32>
    %50 = arith.addf %46, %49 : vector<8x128xf32>
    %51 = math.tanh %50 : vector<8x128xf32>
    %cst_24 = arith.constant 1.000000e+00 : f32
    %52 = vector.broadcast %cst_24 : f32 to vector<8x128xf32>
    %53 = arith.subf %52, %45 : vector<8x128xf32>
    %54 = arith.mulf %53, %51 : vector<8x128xf32>
    %55 = arith.mulf %45, %21 : vector<8x128xf32>
    %56 = arith.addf %54, %55 : vector<8x128xf32>
    %57 = vector.extract_strided_slice %16 {offsets = [1, 0, 0], sizes = [1, 8, 384], strides = [1, 1, 1]} : vector<8x8x384xf32> to vector<1x8x384xf32>
    %58 = vector.shape_cast %57 : vector<1x8x384xf32> to vector<8x384xf32>
    %59 = arith.truncf %56 : vector<8x128xf32> to vector<8x128xbf16>
    %cst_25 = arith.constant dense<0.000000e+00> : vector<8x384xf32>
    %60 = tpu.matmul %59, %17, %cst_25 {dimension_numbers = #tpu.dot_dimension_numbers<[1], [0], [0], [1], [0, 0, 1, 1], [], []>} : vector<8x128xbf16>, vector<128x384xbf16>, vector<8x384xf32> -> vector<8x384xf32>
    %61 = vector.extract_strided_slice %58 {offsets = [0, 0], sizes = [8, 128], strides = [1, 1]} : vector<8x384xf32> to vector<8x128xf32>
    %62 = vector.extract_strided_slice %60 {offsets = [0, 0], sizes = [8, 128], strides = [1, 1]} : vector<8x384xf32> to vector<8x128xf32>
    %63 = arith.addf %61, %62 : vector<8x128xf32>
    %cst_26 = arith.constant 5.000000e-01 : f32
    %64 = vector.broadcast %cst_26 : f32 to vector<8x128xf32>
    %65 = arith.mulf %64, %63 : vector<8x128xf32>
    %66 = math.tanh %65 : vector<8x128xf32>
    %cst_27 = arith.constant 5.000000e-01 : f32
    %67 = vector.broadcast %cst_27 : f32 to vector<8x128xf32>
    %68 = arith.mulf %67, %66 : vector<8x128xf32>
    %cst_28 = arith.constant 5.000000e-01 : f32
    %69 = vector.broadcast %cst_28 : f32 to vector<8x128xf32>
    %70 = arith.addf %68, %69 : vector<8x128xf32>
    %71 = vector.extract_strided_slice %58 {offsets = [0, 128], sizes = [8, 128], strides = [1, 1]} : vector<8x384xf32> to vector<8x128xf32>
    %72 = vector.extract_strided_slice %60 {offsets = [0, 128], sizes = [8, 128], strides = [1, 1]} : vector<8x384xf32> to vector<8x128xf32>
    %73 = arith.addf %71, %72 : vector<8x128xf32>
    %cst_29 = arith.constant 5.000000e-01 : f32
    %74 = vector.broadcast %cst_29 : f32 to vector<8x128xf32>
    %75 = arith.mulf %74, %73 : vector<8x128xf32>
    %76 = math.tanh %75 : vector<8x128xf32>
    %cst_30 = arith.constant 5.000000e-01 : f32
    %77 = vector.broadcast %cst_30 : f32 to vector<8x128xf32>
    %78 = arith.mulf %77, %76 : vector<8x128xf32>
    %cst_31 = arith.constant 5.000000e-01 : f32
    %79 = vector.broadcast %cst_31 : f32 to vector<8x128xf32>
    %80 = arith.addf %78, %79 : vector<8x128xf32>
    %81 = vector.extract_strided_slice %58 {offsets = [0, 256], sizes = [8, 128], strides = [1, 1]} : vector<8x384xf32> to vector<8x128xf32>
    %82 = vector.extract_strided_slice %60 {offsets = [0, 256], sizes = [8, 128], strides = [1, 1]} : vector<8x384xf32> to vector<8x128xf32>
    %83 = arith.addf %82, %20 : vector<8x128xf32>
    %84 = arith.mulf %70, %83 : vector<8x128xf32>
    %85 = arith.addf %81, %84 : vector<8x128xf32>
    %86 = math.tanh %85 : vector<8x128xf32>
    %cst_32 = arith.constant 1.000000e+00 : f32
    %87 = vector.broadcast %cst_32 : f32 to vector<8x128xf32>
    %88 = arith.subf %87, %80 : vector<8x128xf32>
    %89 = arith.mulf %88, %86 : vector<8x128xf32>
    %90 = arith.mulf %80, %56 : vector<8x128xf32>
    %91 = arith.addf %89, %90 : vector<8x128xf32>
    %92 = vector.extract_strided_slice %16 {offsets = [2, 0, 0], sizes = [1, 8, 384], strides = [1, 1, 1]} : vector<8x8x384xf32> to vector<1x8x384xf32>
    %93 = vector.shape_cast %92 : vector<1x8x384xf32> to vector<8x384xf32>
    %94 = arith.truncf %91 : vector<8x128xf32> to vector<8x128xbf16>
    %cst_33 = arith.constant dense<0.000000e+00> : vector<8x384xf32>
    %95 = tpu.matmul %94, %17, %cst_33 {dimension_numbers = #tpu.dot_dimension_numbers<[1], [0], [0], [1], [0, 0, 1, 1], [], []>} : vector<8x128xbf16>, vector<128x384xbf16>, vector<8x384xf32> -> vector<8x384xf32>
    %96 = vector.extract_strided_slice %93 {offsets = [0, 0], sizes = [8, 128], strides = [1, 1]} : vector<8x384xf32> to vector<8x128xf32>
    %97 = vector.extract_strided_slice %95 {offsets = [0, 0], sizes = [8, 128], strides = [1, 1]} : vector<8x384xf32> to vector<8x128xf32>
    %98 = arith.addf %96, %97 : vector<8x128xf32>
    %cst_34 = arith.constant 5.000000e-01 : f32
    %99 = vector.broadcast %cst_34 : f32 to vector<8x128xf32>
    %100 = arith.mulf %99, %98 : vector<8x128xf32>
    %101 = math.tanh %100 : vector<8x128xf32>
    %cst_35 = arith.constant 5.000000e-01 : f32
    %102 = vector.broadcast %cst_35 : f32 to vector<8x128xf32>
    %103 = arith.mulf %102, %101 : vector<8x128xf32>
    %cst_36 = arith.constant 5.000000e-01 : f32
    %104 = vector.broadcast %cst_36 : f32 to vector<8x128xf32>
    %105 = arith.addf %103, %104 : vector<8x128xf32>
    %106 = vector.extract_strided_slice %93 {offsets = [0, 128], sizes = [8, 128], strides = [1, 1]} : vector<8x384xf32> to vector<8x128xf32>
    %107 = vector.extract_strided_slice %95 {offsets = [0, 128], sizes = [8, 128], strides = [1, 1]} : vector<8x384xf32> to vector<8x128xf32>
    %108 = arith.addf %106, %107 : vector<8x128xf32>
    %cst_37 = arith.constant 5.000000e-01 : f32
    %109 = vector.broadcast %cst_37 : f32 to vector<8x128xf32>
    %110 = arith.mulf %109, %108 : vector<8x128xf32>
    %111 = math.tanh %110 : vector<8x128xf32>
    %cst_38 = arith.constant 5.000000e-01 : f32
    %112 = vector.broadcast %cst_38 : f32 to vector<8x128xf32>
    %113 = arith.mulf %112, %111 : vector<8x128xf32>
    %cst_39 = arith.constant 5.000000e-01 : f32
    %114 = vector.broadcast %cst_39 : f32 to vector<8x128xf32>
    %115 = arith.addf %113, %114 : vector<8x128xf32>
    %116 = vector.extract_strided_slice %93 {offsets = [0, 256], sizes = [8, 128], strides = [1, 1]} : vector<8x384xf32> to vector<8x128xf32>
    %117 = vector.extract_strided_slice %95 {offsets = [0, 256], sizes = [8, 128], strides = [1, 1]} : vector<8x384xf32> to vector<8x128xf32>
    %118 = arith.addf %117, %20 : vector<8x128xf32>
    %119 = arith.mulf %105, %118 : vector<8x128xf32>
    %120 = arith.addf %116, %119 : vector<8x128xf32>
    %121 = math.tanh %120 : vector<8x128xf32>
    %cst_40 = arith.constant 1.000000e+00 : f32
    %122 = vector.broadcast %cst_40 : f32 to vector<8x128xf32>
    %123 = arith.subf %122, %115 : vector<8x128xf32>
    %124 = arith.mulf %123, %121 : vector<8x128xf32>
    %125 = arith.mulf %115, %91 : vector<8x128xf32>
    %126 = arith.addf %124, %125 : vector<8x128xf32>
    %127 = vector.extract_strided_slice %16 {offsets = [3, 0, 0], sizes = [1, 8, 384], strides = [1, 1, 1]} : vector<8x8x384xf32> to vector<1x8x384xf32>
    %128 = vector.shape_cast %127 : vector<1x8x384xf32> to vector<8x384xf32>
    %129 = arith.truncf %126 : vector<8x128xf32> to vector<8x128xbf16>
    %cst_41 = arith.constant dense<0.000000e+00> : vector<8x384xf32>
    %130 = tpu.matmul %129, %17, %cst_41 {dimension_numbers = #tpu.dot_dimension_numbers<[1], [0], [0], [1], [0, 0, 1, 1], [], []>} : vector<8x128xbf16>, vector<128x384xbf16>, vector<8x384xf32> -> vector<8x384xf32>
    %131 = vector.extract_strided_slice %128 {offsets = [0, 0], sizes = [8, 128], strides = [1, 1]} : vector<8x384xf32> to vector<8x128xf32>
    %132 = vector.extract_strided_slice %130 {offsets = [0, 0], sizes = [8, 128], strides = [1, 1]} : vector<8x384xf32> to vector<8x128xf32>
    %133 = arith.addf %131, %132 : vector<8x128xf32>
    %cst_42 = arith.constant 5.000000e-01 : f32
    %134 = vector.broadcast %cst_42 : f32 to vector<8x128xf32>
    %135 = arith.mulf %134, %133 : vector<8x128xf32>
    %136 = math.tanh %135 : vector<8x128xf32>
    %cst_43 = arith.constant 5.000000e-01 : f32
    %137 = vector.broadcast %cst_43 : f32 to vector<8x128xf32>
    %138 = arith.mulf %137, %136 : vector<8x128xf32>
    %cst_44 = arith.constant 5.000000e-01 : f32
    %139 = vector.broadcast %cst_44 : f32 to vector<8x128xf32>
    %140 = arith.addf %138, %139 : vector<8x128xf32>
    %141 = vector.extract_strided_slice %128 {offsets = [0, 128], sizes = [8, 128], strides = [1, 1]} : vector<8x384xf32> to vector<8x128xf32>
    %142 = vector.extract_strided_slice %130 {offsets = [0, 128], sizes = [8, 128], strides = [1, 1]} : vector<8x384xf32> to vector<8x128xf32>
    %143 = arith.addf %141, %142 : vector<8x128xf32>
    %cst_45 = arith.constant 5.000000e-01 : f32
    %144 = vector.broadcast %cst_45 : f32 to vector<8x128xf32>
    %145 = arith.mulf %144, %143 : vector<8x128xf32>
    %146 = math.tanh %145 : vector<8x128xf32>
    %cst_46 = arith.constant 5.000000e-01 : f32
    %147 = vector.broadcast %cst_46 : f32 to vector<8x128xf32>
    %148 = arith.mulf %147, %146 : vector<8x128xf32>
    %cst_47 = arith.constant 5.000000e-01 : f32
    %149 = vector.broadcast %cst_47 : f32 to vector<8x128xf32>
    %150 = arith.addf %148, %149 : vector<8x128xf32>
    %151 = vector.extract_strided_slice %128 {offsets = [0, 256], sizes = [8, 128], strides = [1, 1]} : vector<8x384xf32> to vector<8x128xf32>
    %152 = vector.extract_strided_slice %130 {offsets = [0, 256], sizes = [8, 128], strides = [1, 1]} : vector<8x384xf32> to vector<8x128xf32>
    %153 = arith.addf %152, %20 : vector<8x128xf32>
    %154 = arith.mulf %140, %153 : vector<8x128xf32>
    %155 = arith.addf %151, %154 : vector<8x128xf32>
    %156 = math.tanh %155 : vector<8x128xf32>
    %cst_48 = arith.constant 1.000000e+00 : f32
    %157 = vector.broadcast %cst_48 : f32 to vector<8x128xf32>
    %158 = arith.subf %157, %150 : vector<8x128xf32>
    %159 = arith.mulf %158, %156 : vector<8x128xf32>
    %160 = arith.mulf %150, %126 : vector<8x128xf32>
    %161 = arith.addf %159, %160 : vector<8x128xf32>
    %162 = vector.extract_strided_slice %16 {offsets = [4, 0, 0], sizes = [1, 8, 384], strides = [1, 1, 1]} : vector<8x8x384xf32> to vector<1x8x384xf32>
    %163 = vector.shape_cast %162 : vector<1x8x384xf32> to vector<8x384xf32>
    %164 = arith.truncf %161 : vector<8x128xf32> to vector<8x128xbf16>
    %cst_49 = arith.constant dense<0.000000e+00> : vector<8x384xf32>
    %165 = tpu.matmul %164, %17, %cst_49 {dimension_numbers = #tpu.dot_dimension_numbers<[1], [0], [0], [1], [0, 0, 1, 1], [], []>} : vector<8x128xbf16>, vector<128x384xbf16>, vector<8x384xf32> -> vector<8x384xf32>
    %166 = vector.extract_strided_slice %163 {offsets = [0, 0], sizes = [8, 128], strides = [1, 1]} : vector<8x384xf32> to vector<8x128xf32>
    %167 = vector.extract_strided_slice %165 {offsets = [0, 0], sizes = [8, 128], strides = [1, 1]} : vector<8x384xf32> to vector<8x128xf32>
    %168 = arith.addf %166, %167 : vector<8x128xf32>
    %cst_50 = arith.constant 5.000000e-01 : f32
    %169 = vector.broadcast %cst_50 : f32 to vector<8x128xf32>
    %170 = arith.mulf %169, %168 : vector<8x128xf32>
    %171 = math.tanh %170 : vector<8x128xf32>
    %cst_51 = arith.constant 5.000000e-01 : f32
    %172 = vector.broadcast %cst_51 : f32 to vector<8x128xf32>
    %173 = arith.mulf %172, %171 : vector<8x128xf32>
    %cst_52 = arith.constant 5.000000e-01 : f32
    %174 = vector.broadcast %cst_52 : f32 to vector<8x128xf32>
    %175 = arith.addf %173, %174 : vector<8x128xf32>
    %176 = vector.extract_strided_slice %163 {offsets = [0, 128], sizes = [8, 128], strides = [1, 1]} : vector<8x384xf32> to vector<8x128xf32>
    %177 = vector.extract_strided_slice %165 {offsets = [0, 128], sizes = [8, 128], strides = [1, 1]} : vector<8x384xf32> to vector<8x128xf32>
    %178 = arith.addf %176, %177 : vector<8x128xf32>
    %cst_53 = arith.constant 5.000000e-01 : f32
    %179 = vector.broadcast %cst_53 : f32 to vector<8x128xf32>
    %180 = arith.mulf %179, %178 : vector<8x128xf32>
    %181 = math.tanh %180 : vector<8x128xf32>
    %cst_54 = arith.constant 5.000000e-01 : f32
    %182 = vector.broadcast %cst_54 : f32 to vector<8x128xf32>
    %183 = arith.mulf %182, %181 : vector<8x128xf32>
    %cst_55 = arith.constant 5.000000e-01 : f32
    %184 = vector.broadcast %cst_55 : f32 to vector<8x128xf32>
    %185 = arith.addf %183, %184 : vector<8x128xf32>
    %186 = vector.extract_strided_slice %163 {offsets = [0, 256], sizes = [8, 128], strides = [1, 1]} : vector<8x384xf32> to vector<8x128xf32>
    %187 = vector.extract_strided_slice %165 {offsets = [0, 256], sizes = [8, 128], strides = [1, 1]} : vector<8x384xf32> to vector<8x128xf32>
    %188 = arith.addf %187, %20 : vector<8x128xf32>
    %189 = arith.mulf %175, %188 : vector<8x128xf32>
    %190 = arith.addf %186, %189 : vector<8x128xf32>
    %191 = math.tanh %190 : vector<8x128xf32>
    %cst_56 = arith.constant 1.000000e+00 : f32
    %192 = vector.broadcast %cst_56 : f32 to vector<8x128xf32>
    %193 = arith.subf %192, %185 : vector<8x128xf32>
    %194 = arith.mulf %193, %191 : vector<8x128xf32>
    %195 = arith.mulf %185, %161 : vector<8x128xf32>
    %196 = arith.addf %194, %195 : vector<8x128xf32>
    %197 = vector.extract_strided_slice %16 {offsets = [5, 0, 0], sizes = [1, 8, 384], strides = [1, 1, 1]} : vector<8x8x384xf32> to vector<1x8x384xf32>
    %198 = vector.shape_cast %197 : vector<1x8x384xf32> to vector<8x384xf32>
    %199 = arith.truncf %196 : vector<8x128xf32> to vector<8x128xbf16>
    %cst_57 = arith.constant dense<0.000000e+00> : vector<8x384xf32>
    %200 = tpu.matmul %199, %17, %cst_57 {dimension_numbers = #tpu.dot_dimension_numbers<[1], [0], [0], [1], [0, 0, 1, 1], [], []>} : vector<8x128xbf16>, vector<128x384xbf16>, vector<8x384xf32> -> vector<8x384xf32>
    %201 = vector.extract_strided_slice %198 {offsets = [0, 0], sizes = [8, 128], strides = [1, 1]} : vector<8x384xf32> to vector<8x128xf32>
    %202 = vector.extract_strided_slice %200 {offsets = [0, 0], sizes = [8, 128], strides = [1, 1]} : vector<8x384xf32> to vector<8x128xf32>
    %203 = arith.addf %201, %202 : vector<8x128xf32>
    %cst_58 = arith.constant 5.000000e-01 : f32
    %204 = vector.broadcast %cst_58 : f32 to vector<8x128xf32>
    %205 = arith.mulf %204, %203 : vector<8x128xf32>
    %206 = math.tanh %205 : vector<8x128xf32>
    %cst_59 = arith.constant 5.000000e-01 : f32
    %207 = vector.broadcast %cst_59 : f32 to vector<8x128xf32>
    %208 = arith.mulf %207, %206 : vector<8x128xf32>
    %cst_60 = arith.constant 5.000000e-01 : f32
    %209 = vector.broadcast %cst_60 : f32 to vector<8x128xf32>
    %210 = arith.addf %208, %209 : vector<8x128xf32>
    %211 = vector.extract_strided_slice %198 {offsets = [0, 128], sizes = [8, 128], strides = [1, 1]} : vector<8x384xf32> to vector<8x128xf32>
    %212 = vector.extract_strided_slice %200 {offsets = [0, 128], sizes = [8, 128], strides = [1, 1]} : vector<8x384xf32> to vector<8x128xf32>
    %213 = arith.addf %211, %212 : vector<8x128xf32>
    %cst_61 = arith.constant 5.000000e-01 : f32
    %214 = vector.broadcast %cst_61 : f32 to vector<8x128xf32>
    %215 = arith.mulf %214, %213 : vector<8x128xf32>
    %216 = math.tanh %215 : vector<8x128xf32>
    %cst_62 = arith.constant 5.000000e-01 : f32
    %217 = vector.broadcast %cst_62 : f32 to vector<8x128xf32>
    %218 = arith.mulf %217, %216 : vector<8x128xf32>
    %cst_63 = arith.constant 5.000000e-01 : f32
    %219 = vector.broadcast %cst_63 : f32 to vector<8x128xf32>
    %220 = arith.addf %218, %219 : vector<8x128xf32>
    %221 = vector.extract_strided_slice %198 {offsets = [0, 256], sizes = [8, 128], strides = [1, 1]} : vector<8x384xf32> to vector<8x128xf32>
    %222 = vector.extract_strided_slice %200 {offsets = [0, 256], sizes = [8, 128], strides = [1, 1]} : vector<8x384xf32> to vector<8x128xf32>
    %223 = arith.addf %222, %20 : vector<8x128xf32>
    %224 = arith.mulf %210, %223 : vector<8x128xf32>
    %225 = arith.addf %221, %224 : vector<8x128xf32>
    %226 = math.tanh %225 : vector<8x128xf32>
    %cst_64 = arith.constant 1.000000e+00 : f32
    %227 = vector.broadcast %cst_64 : f32 to vector<8x128xf32>
    %228 = arith.subf %227, %220 : vector<8x128xf32>
    %229 = arith.mulf %228, %226 : vector<8x128xf32>
    %230 = arith.mulf %220, %196 : vector<8x128xf32>
    %231 = arith.addf %229, %230 : vector<8x128xf32>
    %232 = vector.extract_strided_slice %16 {offsets = [6, 0, 0], sizes = [1, 8, 384], strides = [1, 1, 1]} : vector<8x8x384xf32> to vector<1x8x384xf32>
    %233 = vector.shape_cast %232 : vector<1x8x384xf32> to vector<8x384xf32>
    %234 = arith.truncf %231 : vector<8x128xf32> to vector<8x128xbf16>
    %cst_65 = arith.constant dense<0.000000e+00> : vector<8x384xf32>
    %235 = tpu.matmul %234, %17, %cst_65 {dimension_numbers = #tpu.dot_dimension_numbers<[1], [0], [0], [1], [0, 0, 1, 1], [], []>} : vector<8x128xbf16>, vector<128x384xbf16>, vector<8x384xf32> -> vector<8x384xf32>
    %236 = vector.extract_strided_slice %233 {offsets = [0, 0], sizes = [8, 128], strides = [1, 1]} : vector<8x384xf32> to vector<8x128xf32>
    %237 = vector.extract_strided_slice %235 {offsets = [0, 0], sizes = [8, 128], strides = [1, 1]} : vector<8x384xf32> to vector<8x128xf32>
    %238 = arith.addf %236, %237 : vector<8x128xf32>
    %cst_66 = arith.constant 5.000000e-01 : f32
    %239 = vector.broadcast %cst_66 : f32 to vector<8x128xf32>
    %240 = arith.mulf %239, %238 : vector<8x128xf32>
    %241 = math.tanh %240 : vector<8x128xf32>
    %cst_67 = arith.constant 5.000000e-01 : f32
    %242 = vector.broadcast %cst_67 : f32 to vector<8x128xf32>
    %243 = arith.mulf %242, %241 : vector<8x128xf32>
    %cst_68 = arith.constant 5.000000e-01 : f32
    %244 = vector.broadcast %cst_68 : f32 to vector<8x128xf32>
    %245 = arith.addf %243, %244 : vector<8x128xf32>
    %246 = vector.extract_strided_slice %233 {offsets = [0, 128], sizes = [8, 128], strides = [1, 1]} : vector<8x384xf32> to vector<8x128xf32>
    %247 = vector.extract_strided_slice %235 {offsets = [0, 128], sizes = [8, 128], strides = [1, 1]} : vector<8x384xf32> to vector<8x128xf32>
    %248 = arith.addf %246, %247 : vector<8x128xf32>
    %cst_69 = arith.constant 5.000000e-01 : f32
    %249 = vector.broadcast %cst_69 : f32 to vector<8x128xf32>
    %250 = arith.mulf %249, %248 : vector<8x128xf32>
    %251 = math.tanh %250 : vector<8x128xf32>
    %cst_70 = arith.constant 5.000000e-01 : f32
    %252 = vector.broadcast %cst_70 : f32 to vector<8x128xf32>
    %253 = arith.mulf %252, %251 : vector<8x128xf32>
    %cst_71 = arith.constant 5.000000e-01 : f32
    %254 = vector.broadcast %cst_71 : f32 to vector<8x128xf32>
    %255 = arith.addf %253, %254 : vector<8x128xf32>
    %256 = vector.extract_strided_slice %233 {offsets = [0, 256], sizes = [8, 128], strides = [1, 1]} : vector<8x384xf32> to vector<8x128xf32>
    %257 = vector.extract_strided_slice %235 {offsets = [0, 256], sizes = [8, 128], strides = [1, 1]} : vector<8x384xf32> to vector<8x128xf32>
    %258 = arith.addf %257, %20 : vector<8x128xf32>
    %259 = arith.mulf %245, %258 : vector<8x128xf32>
    %260 = arith.addf %256, %259 : vector<8x128xf32>
    %261 = math.tanh %260 : vector<8x128xf32>
    %cst_72 = arith.constant 1.000000e+00 : f32
    %262 = vector.broadcast %cst_72 : f32 to vector<8x128xf32>
    %263 = arith.subf %262, %255 : vector<8x128xf32>
    %264 = arith.mulf %263, %261 : vector<8x128xf32>
    %265 = arith.mulf %255, %231 : vector<8x128xf32>
    %266 = arith.addf %264, %265 : vector<8x128xf32>
    %267 = vector.extract_strided_slice %16 {offsets = [7, 0, 0], sizes = [1, 8, 384], strides = [1, 1, 1]} : vector<8x8x384xf32> to vector<1x8x384xf32>
    %268 = vector.shape_cast %267 : vector<1x8x384xf32> to vector<8x384xf32>
    %269 = arith.truncf %266 : vector<8x128xf32> to vector<8x128xbf16>
    %cst_73 = arith.constant dense<0.000000e+00> : vector<8x384xf32>
    %270 = tpu.matmul %269, %17, %cst_73 {dimension_numbers = #tpu.dot_dimension_numbers<[1], [0], [0], [1], [0, 0, 1, 1], [], []>} : vector<8x128xbf16>, vector<128x384xbf16>, vector<8x384xf32> -> vector<8x384xf32>
    %271 = vector.extract_strided_slice %268 {offsets = [0, 0], sizes = [8, 128], strides = [1, 1]} : vector<8x384xf32> to vector<8x128xf32>
    %272 = vector.extract_strided_slice %270 {offsets = [0, 0], sizes = [8, 128], strides = [1, 1]} : vector<8x384xf32> to vector<8x128xf32>
    %273 = arith.addf %271, %272 : vector<8x128xf32>
    %cst_74 = arith.constant 5.000000e-01 : f32
    %274 = vector.broadcast %cst_74 : f32 to vector<8x128xf32>
    %275 = arith.mulf %274, %273 : vector<8x128xf32>
    %276 = math.tanh %275 : vector<8x128xf32>
    %cst_75 = arith.constant 5.000000e-01 : f32
    %277 = vector.broadcast %cst_75 : f32 to vector<8x128xf32>
    %278 = arith.mulf %277, %276 : vector<8x128xf32>
    %cst_76 = arith.constant 5.000000e-01 : f32
    %279 = vector.broadcast %cst_76 : f32 to vector<8x128xf32>
    %280 = arith.addf %278, %279 : vector<8x128xf32>
    %281 = vector.extract_strided_slice %268 {offsets = [0, 128], sizes = [8, 128], strides = [1, 1]} : vector<8x384xf32> to vector<8x128xf32>
    %282 = vector.extract_strided_slice %270 {offsets = [0, 128], sizes = [8, 128], strides = [1, 1]} : vector<8x384xf32> to vector<8x128xf32>
    %283 = arith.addf %281, %282 : vector<8x128xf32>
    %cst_77 = arith.constant 5.000000e-01 : f32
    %284 = vector.broadcast %cst_77 : f32 to vector<8x128xf32>
    %285 = arith.mulf %284, %283 : vector<8x128xf32>
    %286 = math.tanh %285 : vector<8x128xf32>
    %cst_78 = arith.constant 5.000000e-01 : f32
    %287 = vector.broadcast %cst_78 : f32 to vector<8x128xf32>
    %288 = arith.mulf %287, %286 : vector<8x128xf32>
    %cst_79 = arith.constant 5.000000e-01 : f32
    %289 = vector.broadcast %cst_79 : f32 to vector<8x128xf32>
    %290 = arith.addf %288, %289 : vector<8x128xf32>
    %291 = vector.extract_strided_slice %268 {offsets = [0, 256], sizes = [8, 128], strides = [1, 1]} : vector<8x384xf32> to vector<8x128xf32>
    %292 = vector.extract_strided_slice %270 {offsets = [0, 256], sizes = [8, 128], strides = [1, 1]} : vector<8x384xf32> to vector<8x128xf32>
    %293 = arith.addf %292, %20 : vector<8x128xf32>
    %294 = arith.mulf %280, %293 : vector<8x128xf32>
    %295 = arith.addf %291, %294 : vector<8x128xf32>
    %296 = math.tanh %295 : vector<8x128xf32>
    %cst_80 = arith.constant 1.000000e+00 : f32
    %297 = vector.broadcast %cst_80 : f32 to vector<8x128xf32>
    %298 = arith.subf %297, %290 : vector<8x128xf32>
    %299 = arith.mulf %298, %296 : vector<8x128xf32>
    %300 = arith.mulf %290, %266 : vector<8x128xf32>
    %301 = arith.addf %299, %300 : vector<8x128xf32>
    %302 = vector.extract_strided_slice %301 {offsets = [0, 0], sizes = [8, 25], strides = [1, 1]} : vector<8x128xf32> to vector<8x25xf32>
    %c0_81 = arith.constant 0 : index
    %c0_82 = arith.constant 0 : index
    %303 = vector.load %arg8[%c0_81, %c0_82] : memref<8x25xf32, #tpu.memory_space<vmem>>, vector<8x25xf32>
    tpu.vector_store %arg8[%c0_81, %c0_82], %302 {strides = array<i32>} : memref<8x25xf32, #tpu.memory_space<vmem>>, vector<8x25xf32>,
    return
  }
  func.func @transform_0(%arg0: i32) -> (i32, i32, i32) {
    %c0_i32 = arith.constant 0 : i32
    %c0_i32_0 = arith.constant 0 : i32
    %c0_i32_1 = arith.constant 0 : i32
    %c0_i32_2 = arith.constant 0 : i32
    return %c0_i32, %c0_i32_0, %c0_i32_1 : i32, i32, i32
  }
  func.func @transform_1(%arg0: i32) -> (i32, i32) {
    %c0_i32 = arith.constant 0 : i32
    %c0_i32_0 = arith.constant 0 : i32
    %c0_i32_1 = arith.constant 0 : i32
    return %c0_i32, %c0_i32_0 : i32, i32
  }
  func.func @transform_2(%arg0: i32) -> (i32, i32) {
    %c0_i32 = arith.constant 0 : i32
    %c0_i32_0 = arith.constant 0 : i32
    %c0_i32_1 = arith.constant 0 : i32
    return %c0_i32, %c0_i32_0 : i32, i32
  }
  func.func @transform_3(%arg0: i32) -> (i32, i32) {
    %c0_i32 = arith.constant 0 : i32
    %c0_i32_0 = arith.constant 0 : i32
    %c0_i32_1 = arith.constant 0 : i32
    return %c0_i32, %c0_i32_0 : i32, i32
  }
  func.func @transform_4(%arg0: i32) -> (i32, i32) {
    %c0_i32 = arith.constant 0 : i32
    %c0_i32_0 = arith.constant 0 : i32
    %c0_i32_1 = arith.constant 0 : i32
    return %c0_i32, %c0_i32_0 : i32, i32
  }
  func.func @transform_5(%arg0: i32) -> (i32, i32) {
    %c0_i32 = arith.constant 0 : i32
    %c0_i32_0 = arith.constant 0 : i32
    %c0_i32_1 = arith.constant 0 : i32
    return %c0_i32, %c0_i32_0 : i32, i32
  }
  func.func @transform_6(%arg0: i32) -> (i32, i32) {
    %c0_i32 = arith.constant 0 : i32
    %c0_i32_0 = arith.constant 0 : i32
    %c0_i32_1 = arith.constant 0 : i32
    return %c0_i32, %c0_i32_0 : i32, i32
  }
  func.func @transform_7(%arg0: i32) -> (i32, i32) {
    %c0_i32 = arith.constant 0 : i32
    %c0_i32_0 = arith.constant 0 : i32
    %c0_i32_1 = arith.constant 0 : i32
    return %c0_i32, %c0_i32_0 : i32, i32
  }
}

</mosaic_0001>

<llo_original>
// kernel: feature_extractor.1
$region0: #{feature_extractor.1}
  #allocation0 [shape = 'u32[]', space=smem, size = 0x4, offset = 0x4, fixed_abs, tag = 'smem constant byte address 0x4 - core index']
  #allocation1 [shape = 'u32[144,128]{1,0:T(1,128)}', space=vmem, size = 0x12000, scoped, tag = 'internal scratch']
  %s0 = inlined_call_operand.vmem [shape: f32[8,8,25], index: 0, kind: input, shape index: {}]
  %s1 = inlined_call_operand.vmem [shape: f32[25,20], index: 1, kind: input, shape index: {}]
  %s2 = inlined_call_operand.vmem [shape: f32[1,20], index: 2, kind: input, shape index: {}]
  %s3 = inlined_call_operand.vmem [shape: bf16[20,384], index: 3, kind: input, shape index: {}]
  %s4 = inlined_call_operand.vmem [shape: bf16[128,384], index: 4, kind: input, shape index: {}]
  %s5 = inlined_call_operand.vmem [shape: f32[1,384], index: 5, kind: input, shape index: {}]
  %s6 = inlined_call_operand.vmem [shape: f32[1,128], index: 6, kind: input, shape index: {}]
  %s7 = inlined_call_operand.hbm [shape: f32[8,25], index: 7, kind: output, shape index: {}]
  %s8 = sld [smem:[#allocation0]]
  $region38: #{feature_extractor.1} parent=0
    _
  %s10 = ssub.s32 1, %s8
  %s11 = scalar_select 0, %s10, %s8
  $region1: #{feature_extractor.1} parent=0
    #allocation2 [shape = 'u8[4096]{0}', space=vmem, size = 0x1000, scoped, tag = 'output window, operand 0, single buffered']
    #allocation3 [shape = 's32[1]{0}', space=sflag, size = 0x4, scoped, tag = 'scoped memory for feature_extractor.1']
    %12 = vsyncpa [#allocation3], 0
    // Predicated region
    $region2: #{feature_extractor.1} parent=1 // pred_check
      _
    $region3: #{feature_extractor.1} parent=1 // pred_check_branch
      %14 = sbr.rel (0) target = $region5
    $region4: #{feature_extractor.1} parent=1 // pred_region
      _
    $region5: #{feature_extractor.1} parent=1 // pred_fallthru
      _
    // Predicated region
    $region6: #{feature_extractor.1} parent=1 // pred_check
      _
    $region7: #{feature_extractor.1} parent=1 // pred_check_branch
      %16 = sbr.rel (0) target = $region9
    $region8: #{feature_extractor.1} parent=1 // pred_region
      _
    $region9: #{feature_extractor.1} parent=1 // pred_fallthru
      _
    // Predicated region
    $region10: #{feature_extractor.1} parent=1 // pred_check
      _
    $region11: #{feature_extractor.1} parent=1 // pred_check_branch
      %18 = sbr.rel (0) target = $region13
    $region12: #{feature_extractor.1} parent=1 // pred_region
      _
    $region13: #{feature_extractor.1} parent=1 // pred_fallthru
      _
    // Predicated region
    $region14: #{feature_extractor.1} parent=1 // pred_check
      _
    $region15: #{feature_extractor.1} parent=1 // pred_check_branch
      %20 = sbr.rel (0) target = $region17
    $region16: #{feature_extractor.1} parent=1 // pred_region
      _
    $region17: #{feature_extractor.1} parent=1 // pred_fallthru
      _
    // Predicated region
    $region18: #{feature_extractor.1} parent=1 // pred_check
      _
    $region19: #{feature_extractor.1} parent=1 // pred_check_branch
      %22 = sbr.rel (0) target = $region21
    $region20: #{feature_extractor.1} parent=1 // pred_region
      _
    $region21: #{feature_extractor.1} parent=1 // pred_fallthru
      _
    // Predicated region
    $region22: #{feature_extractor.1} parent=1 // pred_check
      _
    $region23: #{feature_extractor.1} parent=1 // pred_check_branch
      %24 = sbr.rel (0) target = $region25
    $region24: #{feature_extractor.1} parent=1 // pred_region
      _
    $region25: #{feature_extractor.1} parent=1 // pred_fallthru
      _
    // Predicated region
    $region26: #{feature_extractor.1} parent=1 // pred_check
      _
    $region27: #{feature_extractor.1} parent=1 // pred_check_branch
      %26 = sbr.rel (0) target = $region29
    $region28: #{feature_extractor.1} parent=1 // pred_region
      _
    $region29: #{feature_extractor.1} parent=1 // pred_fallthru
      _
    %v28 = vld [vmem:[%s0] sm:$0xff]
    %v29 = vld [vmem:[%s0 + $0x8] sm:$0xff]
    %v30 = vld [vmem:[%s0 + $0x10] sm:$0xff]
    %v31 = vld [vmem:[%s0 + $0x18] sm:$0xff]
    %v32 = vld [vmem:[%s0 + $0x20] sm:$0xff]
    %v33 = vld [vmem:[%s0 + $0x28] sm:$0xff]
    %v34 = vld [vmem:[%s0 + $0x30] sm:$0xff]
    %v35 = vld [vmem:[%s0 + $0x38] sm:$0xff]
    %v36 = vld [vmem:[%s1] sm:$0xff]
    %v37 = vld [vmem:[%s1 + $0x8] sm:$0xff]
    %v38 = vld [vmem:[%s1 + $0x10] sm:$0xff]
    %v39 = vld [vmem:[%s1 + $0x18] sm:$0x1]
    %v40 = vld [vmem:[%s2] sm:$0x1]
    %v42 = vlaneseq
    %v43 = vshrl.u32 %v42, 7
    %v44 = vsub.s32 0, %v43
    %v45 = vrot.slane %v40, %v44
    %vm47 = vcmask 203776
    %v49 = vsel %vm47, %v28, 0
    %v52 = vsel %vm47, %v29, 0
    %v55 = vsel %vm47, %v30, 0
    %v58 = vsel %vm47, %v31, 0
    %v61 = vsel %vm47, %v32, 0
    %v64 = vsel %vm47, %v33, 0
    %v67 = vsel %vm47, %v34, 0
    %v70 = vsel %vm47, %v35, 0
    %vm72 = vcmask 1040384
    %v74 = vsel %vm72, %v39, 0
    %76 = vmatprep.subr.mxu0 0.0
    %77 = vmatpush1.msra.mxu0 %v36
    %78 = vmatprep.subr.mxu0 0.0
    %79 = vmatpush1.msra.mxu0 %v37
    %80 = vmatprep.subr.mxu0 0.0
    %81 = vmatpush1.msra.mxu0 %v38
    %82 = vmatprep.subr.mxu0 0.0
    %83 = vmatpush1.msra.mxu0 %v74
    %84 = vmatprep.subr.mxu0 0.0
    %85 = vmatpush1.msra.mxu0 0.0
    %86 = vmatprep.subr.mxu0 0.0
    %87 = vmatpush1.msra.mxu0 0.0
    %88 = vmatprep.subr.mxu0 0.0
    %89 = vmatpush1.msra.mxu0 0.0
    %90 = vmatprep.subr.mxu0 0.0
    %91 = vmatpush1.msra.mxu0 0.0
    %92 = vmatprep.subr.mxu0 0.0
    %93 = vmatpush1.msra.mxu0 0.0
    %94 = vmatprep.subr.mxu0 0.0
    %95 = vmatpush1.msra.mxu0 0.0
    %96 = vmatprep.subr.mxu0 0.0
    %97 = vmatpush1.msra.mxu0 0.0
    %98 = vmatprep.subr.mxu0 0.0
    %99 = vmatpush1.msra.mxu0 0.0
    %100 = vmatprep.subr.mxu0 0.0
    %101 = vmatpush1.msra.mxu0 0.0
    %102 = vmatprep.subr.mxu0 0.0
    %103 = vmatpush1.msra.mxu0 0.0
    %104 = vmatprep.subr.mxu0 0.0
    %105 = vmatpush1.msra.mxu0 0.0
    %106 = vmatprep.subr.mxu0 0.0
    %107 = vmatpush1.msra.mxu0 0.0
    %108 = vmatprep.subr.mxu0 0.0
    %109 = vmatpush1.msra.mxu0 0.0
    %110 = vmatprep.subr.mxu0 0.0
    %111 = vmatpush1.msra.mxu0 0.0
    %112 = vmatprep.subr.mxu0 0.0
    %113 = vmatpush1.msra.mxu0 0.0
    %114 = vmatprep.subr.mxu0 0.0
    %115 = vmatpush1.msra.mxu0 0.0
    %116 = vmatprep.subr.mxu0 0.0
    %117 = vmatpush1.msra.mxu0 0.0
    %118 = vmatprep.subr.mxu0 0.0
    %119 = vmatpush1.msra.mxu0 0.0
    %120 = vmatprep.subr.mxu0 0.0
    %121 = vmatpush1.msra.mxu0 0.0
    %122 = vmatprep.subr.mxu0 0.0
    %123 = vmatpush1.msra.mxu0 0.0
    %124 = vmatprep.subr.mxu0 0.0
    %125 = vmatpush1.msra.mxu0 0.0
    %126 = vmatprep.subr.mxu0 0.0
    %127 = vmatpush1.msra.mxu0 0.0
    %128 = vmatprep.subr.mxu0 0.0
    %129 = vmatpush1.msra.mxu0 0.0
    %130 = vmatprep.subr.mxu0 0.0
    %131 = vmatpush1.msra.mxu0 0.0
    %132 = vmatprep.subr.mxu0 0.0
    %133 = vmatpush1.msra.mxu0 0.0
    %134 = vmatprep.subr.mxu0 0.0
    %135 = vmatpush1.msra.mxu0 0.0
    %136 = vmatprep.subr.mxu0 0.0
    %137 = vmatpush1.msra.mxu0 0.0
    %138 = vmatprep.subr.mxu0 0.0
    %139 = vmatpush1.msra.mxu0 0.0
    %140 = vmatprep.mubr.f32.mxu0 0.0
    %141 = vmatmul.mubr.f32.gmra.mrb[0].mxu0 %v49
    %v142 = vpop.f32.mrb[0].mxu0
    %v143 = vadd.f32 %v45, %v142
    %v144 = vpop.f32.mrb[0].mxu0
    %145 = vmatprep.mubr.f32.mxu0 0.0
    %146 = vmatmul.mubr.f32.gmra.mrb[0].mxu0 %v52
    %v147 = vpop.f32.mrb[0].mxu0
    %v148 = vadd.f32 %v45, %v147
    %v149 = vpop.f32.mrb[0].mxu0
    %150 = vmatprep.mubr.f32.mxu0 0.0
    %151 = vmatmul.mubr.f32.gmra.mrb[0].mxu0 %v55
    %v152 = vpop.f32.mrb[0].mxu0
    %v153 = vadd.f32 %v45, %v152
    %v154 = vpop.f32.mrb[0].mxu0
    %155 = vmatprep.mubr.f32.mxu0 0.0
    %156 = vmatmul.mubr.f32.gmra.mrb[0].mxu0 %v58
    %v157 = vpop.f32.mrb[0].mxu0
    %v158 = vadd.f32 %v45, %v157
    %v159 = vpop.f32.mrb[0].mxu0
    %160 = vmatprep.mubr.f32.mxu0 0.0
    %161 = vmatmul.mubr.f32.gmra.mrb[0].mxu0 %v61
    %v162 = vpop.f32.mrb[0].mxu0
    %v163 = vadd.f32 %v45, %v162
    %v164 = vpop.f32.mrb[0].mxu0
    %165 = vmatprep.mubr.f32.mxu0 0.0
    %166 = vmatmul.mubr.f32.gmra.mrb[0].mxu0 %v64
    %v167 = vpop.f32.mrb[0].mxu0
    %v168 = vadd.f32 %v45, %v167
    %v169 = vpop.f32.mrb[0].mxu0
    %170 = vmatprep.mubr.f32.mxu0 0.0
    %171 = vmatmul.mubr.f32.gmra.mrb[0].mxu0 %v67
    %v172 = vpop.f32.mrb[0].mxu0
    %v173 = vadd.f32 %v45, %v172
    %v174 = vpop.f32.mrb[0].mxu0
    %175 = vmatprep.mubr.f32.mxu0 0.0
    %176 = vmatmul.mubr.f32.gmra.mrb[0].mxu0 %v70
    %v177 = vpop.f32.mrb[0].mxu0
    %v178 = vadd.f32 %v45, %v177
    %v179 = vpop.f32.mrb[0].mxu0
    %180 = vdwg.mxu0
    %v181 = vmul.f32 %v143, 0.01
    %v182 = vmul.f32 %v148, 0.01
    %v183 = vmul.f32 %v153, 0.01
    %v184 = vmul.f32 %v158, 0.01
    %v185 = vmul.f32 %v163, 0.01
    %v186 = vmul.f32 %v168, 0.01
    %v187 = vmul.f32 %v173, 0.01
    %v188 = vmul.f32 %v178, 0.01
    %v189 = vmax.f32 %v143, %v181
    %v190 = vmax.f32 %v148, %v182
    %v191 = vmax.f32 %v153, %v183
    %v192 = vmax.f32 %v158, %v184
    %v193 = vmax.f32 %v163, %v185
    %v194 = vmax.f32 %v168, %v186
    %v195 = vmax.f32 %v173, %v187
    %v196 = vmax.f32 %v178, %v188
    %v197 = vpack.c.bf16 %v190, %v189
    %v198 = vpack.c.bf16 %v192, %v191
    %v199 = vpack.c.bf16 %v194, %v193
    %v200 = vpack.c.bf16 %v196, %v195
    %v201 = vld [vmem:[%s3] sm:$0xff]
    %v202 = vld [vmem:[%s3 + $0x8] sm:$0xf]
    %v203 = vld [vmem:[%s3 + $0xc] sm:$0xff]
    %v204 = vld [vmem:[%s3 + $0x14] sm:$0xf]
    %v205 = vld [vmem:[%s3 + $0x18] sm:$0x33]
    %v206 = vld [vmem:[%s3 + $0x20] sm:$0x3]
    %v207 = vld [vmem:[%s5] sm:$0x7]
    %v209 = vlaneseq
    %v210 = vshrl.u32 %v209, 7
    %v211 = vsub.s32 0, %v210
    %v212 = vrot.slane %v207, %v211
    %v213 = vlaneseq
    %v214 = vshrl.u32 %v213, 7
    %v215 = vsub.s32 1, %v214
    %v216 = vrot.slane %v207, %v215
    %v217 = vlaneseq
    %v218 = vshrl.u32 %v217, 7
    %v219 = vsub.s32 2, %v218
    %v220 = vrot.slane %v207, %v219
    %v230 = vunpack.c.l.b16 %v201
    %v231 = vunpack.c.h.b16 %v201
    %v232 = vunpack.c.l.b16 %v202
    %v233 = vunpack.c.l.b16 %v203
    %v234 = vunpack.c.h.b16 %v203
    %v235 = vunpack.c.l.b16 %v204
    %v236 = vunpack.c.l.b16 %v205
    %v237 = vunpack.c.h.b16 %v205
    %v238 = vunpack.c.l.b16 %v206
    %v239 = vpack.c.b16 %v233, %v230
    %v240 = vpack.c.b16 %v234, %v231
    %v241 = vpack.c.b16 %v235, %v232
    %v242 = vpack.c.b16 %v236, %v236
    %v243 = vpack.c.b16 %v237, %v237
    %v244 = vpack.c.b16 %v238, %v238
    %vm248 = vcmask 162816
    %v250 = vsel %vm248, %v197, 0
    %v253 = vsel %vm248, %v198, 0
    %v256 = vsel %vm248, %v199, 0
    %v259 = vsel %vm248, %v200, 0
    %vm261 = vcmask 1041408
    %v263 = vsel %vm261, %v242, 0
    %v266 = vsel %vm261, %v243, 0
    %v269 = vsel %vm261, %v244, 0
    %271 = vmatprep.subr.bf16.mxu0 %v240
    %272 = vmatpush1.bf16.msra.mxu0 %v239
    %273 = vmatprep.subr.bf16.mxu0 %v266
    %274 = vmatpush1.bf16.msra.mxu0 %v263
    %275 = vmatprep.subr.bf16.mxu0 0
    %276 = vmatpush1.bf16.msra.mxu0 0
    %277 = vmatprep.subr.bf16.mxu0 0
    %278 = vmatpush1.bf16.msra.mxu0 0
    %279 = vmatprep.subr.bf16.mxu0 0
    %280 = vmatpush1.bf16.msra.mxu0 0
    %281 = vmatprep.subr.bf16.mxu0 0
    %282 = vmatpush1.bf16.msra.mxu0 0
    %283 = vmatprep.subr.bf16.mxu0 0
    %284 = vmatpush1.bf16.msra.mxu0 0
    %285 = vmatprep.subr.bf16.mxu0 0
    %286 = vmatpush1.bf16.msra.mxu0 0
    %287 = vmatprep.subr.bf16.mxu0 0
    %288 = vmatpush1.bf16.msra.mxu0 0
    %289 = vmatprep.subr.bf16.mxu0 0
    %290 = vmatpush1.bf16.msra.mxu0 0
    %291 = vmatprep.subr.bf16.mxu0 0
    %292 = vmatpush1.bf16.msra.mxu0 0
    %293 = vmatprep.subr.bf16.mxu0 0
    %294 = vmatpush1.bf16.msra.mxu0 0
    %295 = vmatprep.subr.bf16.mxu0 0
    %296 = vmatpush1.bf16.msra.mxu0 0
    %297 = vmatprep.subr.bf16.mxu0 0
    %298 = vmatpush1.bf16.msra.mxu0 0
    %299 = vmatprep.subr.bf16.mxu0 0
    %300 = vmatpush1.bf16.msra.mxu0 0
    %301 = vmatprep.subr.bf16.mxu0 0
    %302 = vmatpush1.bf16.msra.mxu0 0
    %303 = vmatprep.mubr.bf16.mxu0 0
    %304 = vmatmul.mubr.bf16.gmra.mrb[0].mxu0 %v250
    %v305 = vpop.f32.mrb[0].mxu0
    %v306 = vadd.f32 %v212, %v305
    %v307 = vpop.f32.mrb[0].mxu0
    %v308 = vadd.f32 %v216, %v307
    %v309 = vpop.f32.mrb[0].mxu0
    %v310 = vadd.f32 %v212, %v309
    %v311 = vpop.f32.mrb[0].mxu0
    %v312 = vadd.f32 %v216, %v311
    %313 = vmatprep.mubr.bf16.mxu0 0
    %314 = vmatmul.mubr.bf16.gmra.mrb[0].mxu0 %v253
    %v315 = vpop.f32.mrb[0].mxu0
    %v316 = vadd.f32 %v212, %v315
    %v317 = vpop.f32.mrb[0].mxu0
    %v318 = vadd.f32 %v216, %v317
    %v319 = vpop.f32.mrb[0].mxu0
    %v320 = vadd.f32 %v212, %v319
    %v321 = vpop.f32.mrb[0].mxu0
    %v322 = vadd.f32 %v216, %v321
    %323 = vmatprep.mubr.bf16.mxu0 0
    %324 = vmatmul.mubr.bf16.gmra.mrb[0].mxu0 %v256
    %v325 = vpop.f32.mrb[0].mxu0
    %v326 = vadd.f32 %v212, %v325
    %v327 = vpop.f32.mrb[0].mxu0
    %v328 = vadd.f32 %v216, %v327
    %v329 = vpop.f32.mrb[0].mxu0
    %v330 = vadd.f32 %v212, %v329
    %v331 = vpop.f32.mrb[0].mxu0
    %v332 = vadd.f32 %v216, %v331
    %333 = vmatprep.mubr.bf16.mxu0 0
    %334 = vmatmul.mubr.bf16.gmra.mrb[0].mxu0 %v259
    %v335 = vpop.f32.mrb[0].mxu0
    %v336 = vadd.f32 %v212, %v335
    %v337 = vpop.f32.mrb[0].mxu0
    %v338 = vadd.f32 %v216, %v337
    %v339 = vpop.f32.mrb[0].mxu0
    %v340 = vadd.f32 %v212, %v339
    %v341 = vpop.f32.mrb[0].mxu0
    %v342 = vadd.f32 %v216, %v341
    %343 = vdwg.mxu0
    %344 = vmatprep.subr.bf16.mxu0 0
    %345 = vmatpush1.bf16.msra.mxu0 %v241
    %346 = vmatprep.subr.bf16.mxu0 0
    %347 = vmatpush1.bf16.msra.mxu0 %v269
    %348 = vmatprep.subr.bf16.mxu0 0
    %349 = vmatpush1.bf16.msra.mxu0 0
    %350 = vmatprep.subr.bf16.mxu0 0
    %351 = vmatpush1.bf16.msra.mxu0 0
    %352 = vmatprep.subr.bf16.mxu0 0
    %353 = vmatpush1.bf16.msra.mxu0 0
    %354 = vmatprep.subr.bf16.mxu0 0
    %355 = vmatpush1.bf16.msra.mxu0 0
    %356 = vmatprep.subr.bf16.mxu0 0
    %357 = vmatpush1.bf16.msra.mxu0 0
    %358 = vmatprep.subr.bf16.mxu0 0
    %359 = vmatpush1.bf16.msra.mxu0 0
    %360 = vmatprep.subr.bf16.mxu0 0
    %361 = vmatpush1.bf16.msra.mxu0 0
    %362 = vmatprep.subr.bf16.mxu0 0
    %363 = vmatpush1.bf16.msra.mxu0 0
    %364 = vmatprep.subr.bf16.mxu0 0
    %365 = vmatpush1.bf16.msra.mxu0 0
    %366 = vmatprep.subr.bf16.mxu0 0
    %367 = vmatpush1.bf16.msra.mxu0 0
    %368 = vmatprep.subr.bf16.mxu0 0
    %369 = vmatpush1.bf16.msra.mxu0 0
    %370 = vmatprep.subr.bf16.mxu0 0
    %371 = vmatpush1.bf16.msra.mxu0 0
    %372 = vmatprep.subr.bf16.mxu0 0
    %373 = vmatpush1.bf16.msra.mxu0 0
    %374 = vmatprep.subr.bf16.mxu0 0
    %375 = vmatpush1.bf16.msra.mxu0 0
    %376 = vmatprep.mubr.bf16.mxu0 0
    %377 = vmatmul.mubr.bf16.gmra.mrb[0].mxu0 %v250
    %v378 = vpop.f32.mrb[0].mxu0
    %v379 = vadd.f32 %v220, %v378
    %v380 = vpop.f32.mrb[0].mxu0
    %v381 = vpop.f32.mrb[0].mxu0
    %v382 = vadd.f32 %v220, %v381
    %v383 = vpop.f32.mrb[0].mxu0
    %384 = vmatprep.mubr.bf16.mxu0 0
    %385 = vmatmul.mubr.bf16.gmra.mrb[0].mxu0 %v253
    %v386 = vpop.f32.mrb[0].mxu0
    %v387 = vadd.f32 %v220, %v386
    %v388 = vpop.f32.mrb[0].mxu0
    %v389 = vpop.f32.mrb[0].mxu0
    %v390 = vadd.f32 %v220, %v389
    %v391 = vpop.f32.mrb[0].mxu0
    %392 = vmatprep.mubr.bf16.mxu0 0
    %393 = vmatmul.mubr.bf16.gmra.mrb[0].mxu0 %v256
    %v394 = vpop.f32.mrb[0].mxu0
    %v395 = vadd.f32 %v220, %v394
    %v396 = vpop.f32.mrb[0].mxu0
    %v397 = vpop.f32.mrb[0].mxu0
    %v398 = vadd.f32 %v220, %v397
    %v399 = vpop.f32.mrb[0].mxu0
    %400 = vmatprep.mubr.bf16.mxu0 0
    %401 = vmatmul.mubr.bf16.gmra.mrb[0].mxu0 %v259
    %v402 = vpop.f32.mrb[0].mxu0
    %v403 = vadd.f32 %v220, %v402
    %v404 = vpop.f32.mrb[0].mxu0
    %v405 = vpop.f32.mrb[0].mxu0
    %v406 = vadd.f32 %v220, %v405
    %v407 = vpop.f32.mrb[0].mxu0
    %408 = vdwg.mxu0
    %v409 = vld [vmem:[%s4] sm:$0xff]
    %v410 = vld [vmem:[%s4 + $0x8] sm:$0xf]
    %v411 = vld [vmem:[%s4 + $0xc] sm:$0xff]
    %v412 = vld [vmem:[%s4 + $0x14] sm:$0xf]
    %v413 = vld [vmem:[%s4 + $0x18] sm:$0xff]
    %v414 = vld [vmem:[%s4 + $0x20] sm:$0xf]
    %v415 = vld [vmem:[%s4 + $0x24] sm:$0xff]
    %v416 = vld [vmem:[%s4 + $0x2c] sm:$0xf]
    %v417 = vld [vmem:[%s4 + $0x30] sm:$0xff]
    %v418 = vld [vmem:[%s4 + $0x38] sm:$0xf]
    %v419 = vld [vmem:[%s4 + $0x3c] sm:$0xff]
    %v420 = vld [vmem:[%s4 + $0x44] sm:$0xf]
    %v421 = vld [vmem:[%s4 + $0x48] sm:$0xff]
    %v422 = vld [vmem:[%s4 + $0x50] sm:$0xf]
    %v423 = vld [vmem:[%s4 + $0x54] sm:$0xff]
    %v424 = vld [vmem:[%s4 + $0x5c] sm:$0xf]
    %v425 = vld [vmem:[%s4 + $0x60] sm:$0xff]
    %v426 = vld [vmem:[%s4 + $0x68] sm:$0xf]
    %v427 = vld [vmem:[%s4 + $0x6c] sm:$0xff]
    %v428 = vld [vmem:[%s4 + $0x74] sm:$0xf]
    %v429 = vld [vmem:[%s4 + $0x78] sm:$0xff]
    %v430 = vld [vmem:[%s4 + $0x80] sm:$0xf]
    %v431 = vld [vmem:[%s4 + $0x84] sm:$0xff]
    %v432 = vld [vmem:[%s4 + $0x8c] sm:$0xf]
    %v433 = vld [vmem:[%s4 + $0x90] sm:$0xff]
    %v434 = vld [vmem:[%s4 + $0x98] sm:$0xf]
    %v435 = vld [vmem:[%s4 + $0x9c] sm:$0xff]
    %v436 = vld [vmem:[%s4 + $0xa4] sm:$0xf]
    %v437 = vld [vmem:[%s4 + $0xa8] sm:$0xff]
    %v438 = vld [vmem:[%s4 + $0xb0] sm:$0xf]
    %v439 = vld [vmem:[%s4 + $0xb4] sm:$0xff]
    %v440 = vld [vmem:[%s4 + $0xbc] sm:$0xf]
    %v441 = vld [vmem:[%s6] sm:$0x1]
    %v443 = vlaneseq
    %v444 = vshrl.u32 %v443, 7
    %v445 = vsub.s32 0, %v444
    %v446 = vrot.slane %v441, %v445
    %v480 = vunpack.c.l.b16 %v409
    %v481 = vunpack.c.h.b16 %v409
    %v482 = vunpack.c.l.b16 %v410
    %v483 = vunpack.c.l.b16 %v411
    %v484 = vunpack.c.h.b16 %v411
    %v485 = vunpack.c.l.b16 %v412
    %v486 = vunpack.c.l.b16 %v413
    %v487 = vunpack.c.h.b16 %v413
    %v488 = vunpack.c.l.b16 %v414
    %v489 = vunpack.c.l.b16 %v415
    %v490 = vunpack.c.h.b16 %v415
    %v491 = vunpack.c.l.b16 %v416
    %v492 = vunpack.c.l.b16 %v417
    %v493 = vunpack.c.h.b16 %v417
    %v494 = vunpack.c.l.b16 %v418
    %v495 = vunpack.c.l.b16 %v419
    %v496 = vunpack.c.h.b16 %v419
    %v497 = vunpack.c.l.b16 %v420
    %v498 = vunpack.c.l.b16 %v421
    %v499 = vunpack.c.h.b16 %v421
    %v500 = vunpack.c.l.b16 %v422
    %v501 = vunpack.c.l.b16 %v423
    %v502 = vunpack.c.h.b16 %v423
    %v503 = vunpack.c.l.b16 %v424
    %v504 = vunpack.c.l.b16 %v425
    %v505 = vunpack.c.h.b16 %v425
    %v506 = vunpack.c.l.b16 %v426
    %v507 = vunpack.c.l.b16 %v427
    %v508 = vunpack.c.h.b16 %v427
    %v509 = vunpack.c.l.b16 %v428
    %v510 = vunpack.c.l.b16 %v429
    %v511 = vunpack.c.h.b16 %v429
    %v512 = vunpack.c.l.b16 %v430
    %v513 = vunpack.c.l.b16 %v431
    %v514 = vunpack.c.h.b16 %v431
    %v515 = vunpack.c.l.b16 %v432
    %v516 = vunpack.c.l.b16 %v433
    %v517 = vunpack.c.h.b16 %v433
    %v518 = vunpack.c.l.b16 %v434
    %v519 = vunpack.c.l.b16 %v435
    %v520 = vunpack.c.h.b16 %v435
    %v521 = vunpack.c.l.b16 %v436
    %v522 = vunpack.c.l.b16 %v437
    %v523 = vunpack.c.h.b16 %v437
    %v524 = vunpack.c.l.b16 %v438
    %v525 = vunpack.c.l.b16 %v439
    %v526 = vunpack.c.h.b16 %v439
    %v527 = vunpack.c.l.b16 %v440
    %v528 = vpack.c.b16 %v483, %v480
    %v529 = vpack.c.b16 %v484, %v481
    %v530 = vpack.c.b16 %v485, %v482
    %v531 = vpack.c.b16 %v489, %v486
    %v532 = vpack.c.b16 %v490, %v487
    %v533 = vpack.c.b16 %v491, %v488
    %v534 = vpack.c.b16 %v495, %v492
    %v535 = vpack.c.b16 %v496, %v493
    %v536 = vpack.c.b16 %v497, %v494
    %v537 = vpack.c.b16 %v501, %v498
    %v538 = vpack.c.b16 %v502, %v499
    %v539 = vpack.c.b16 %v503, %v500
    %v540 = vpack.c.b16 %v507, %v504
    %v541 = vpack.c.b16 %v508, %v505
    %v542 = vpack.c.b16 %v509, %v506
    %v543 = vpack.c.b16 %v513, %v510
    %v544 = vpack.c.b16 %v514, %v511
    %v545 = vpack.c.b16 %v515, %v512
    %v546 = vpack.c.b16 %v519, %v516
    %v547 = vpack.c.b16 %v520, %v517
    %v548 = vpack.c.b16 %v521, %v518
    %v549 = vpack.c.b16 %v525, %v522
    %v550 = vpack.c.b16 %v526, %v523
    %v551 = vpack.c.b16 %v527, %v524
    %576 = vmatprep.subr.bf16.mxu0 %v529
    %577 = vmatpush1.bf16.msra.mxu0 %v528
    %578 = vmatprep.subr.bf16.mxu0 %v532
    %579 = vmatpush1.bf16.msra.mxu0 %v531
    %580 = vmatprep.subr.bf16.mxu0 %v535
    %581 = vmatpush1.bf16.msra.mxu0 %v534
    %582 = vmatprep.subr.bf16.mxu0 %v538
    %583 = vmatpush1.bf16.msra.mxu0 %v537
    %584 = vmatprep.subr.bf16.mxu0 %v541
    %585 = vmatpush1.bf16.msra.mxu0 %v540
    %586 = vmatprep.subr.bf16.mxu0 %v544
    %587 = vmatpush1.bf16.msra.mxu0 %v543
    %588 = vmatprep.subr.bf16.mxu0 %v547
    %589 = vmatpush1.bf16.msra.mxu0 %v546
    %590 = vmatprep.subr.bf16.mxu0 %v550
    %591 = vmatpush1.bf16.msra.mxu0 %v549
    %592 = vmatprep.subr.bf16.mxu0 0
    %593 = vmatpush1.bf16.msra.mxu0 0
    %594 = vmatprep.subr.bf16.mxu0 0
    %595 = vmatpush1.bf16.msra.mxu0 0
    %596 = vmatprep.subr.bf16.mxu0 0
    %597 = vmatpush1.bf16.msra.mxu0 0
    %598 = vmatprep.subr.bf16.mxu0 0
    %599 = vmatpush1.bf16.msra.mxu0 0
    %600 = vmatprep.subr.bf16.mxu0 0
    %601 = vmatpush1.bf16.msra.mxu0 0
    %602 = vmatprep.subr.bf16.mxu0 0
    %603 = vmatpush1.bf16.msra.mxu0 0
    %604 = vmatprep.subr.bf16.mxu0 0
    %605 = vmatpush1.bf16.msra.mxu0 0
    %606 = vmatprep.subr.bf16.mxu0 0
    %607 = vmatpush1.bf16.msra.mxu0 0
    %608 = vmatprep.mubr.bf16.mxu0 0
    %609 = vmatmul.mubr.bf16.gmra.mrb[0].mxu0 0
    %v610 = vpop.f32.mrb[0].mxu0
    %v611 = vadd.f32 0.0, %v610
    %v612 = vpop.f32.mrb[0].mxu0
    %v613 = vadd.f32 0.0, %v612
    %v614 = vpop.f32.mrb[0].mxu0
    %v615 = vpop.f32.mrb[0].mxu0
    %616 = vdwg.mxu0
    %617 = vmatprep.subr.bf16.mxu0 0
    %618 = vmatpush1.bf16.msra.mxu0 %v530
    %619 = vmatprep.subr.bf16.mxu0 0
    %620 = vmatpush1.bf16.msra.mxu0 %v533
    %621 = vmatprep.subr.bf16.mxu0 0
    %622 = vmatpush1.bf16.msra.mxu0 %v536
    %623 = vmatprep.subr.bf16.mxu0 0
    %624 = vmatpush1.bf16.msra.mxu0 %v539
    %625 = vmatprep.subr.bf16.mxu0 0
    %626 = vmatpush1.bf16.msra.mxu0 %v542
    %627 = vmatprep.subr.bf16.mxu0 0
    %628 = vmatpush1.bf16.msra.mxu0 %v545
    %629 = vmatprep.subr.bf16.mxu0 0
    %630 = vmatpush1.bf16.msra.mxu0 %v548
    %631 = vmatprep.subr.bf16.mxu0 0
    %632 = vmatpush1.bf16.msra.mxu0 %v551
    %633 = vmatprep.subr.bf16.mxu0 0
    %634 = vmatpush1.bf16.msra.mxu0 0
    %635 = vmatprep.subr.bf16.mxu0 0
    %636 = vmatpush1.bf16.msra.mxu0 0
    %637 = vmatprep.subr.bf16.mxu0 0
    %638 = vmatpush1.bf16.msra.mxu0 0
    %639 = vmatprep.subr.bf16.mxu0 0
    %640 = vmatpush1.bf16.msra.mxu0 0
    %641 = vmatprep.subr.bf16.mxu0 0
    %642 = vmatpush1.bf16.msra.mxu0 0
    %643 = vmatprep.subr.bf16.mxu0 0
    %644 = vmatpush1.bf16.msra.mxu0 0
    %645 = vmatprep.subr.bf16.mxu0 0
    %646 = vmatpush1.bf16.msra.mxu0 0
    %647 = vmatprep.subr.bf16.mxu0 0
    %648 = vmatpush1.bf16.msra.mxu0 0
    %649 = vmatprep.mubr.bf16.mxu0 0
    %650 = vmatmul.mubr.bf16.gmra.mrb[0].mxu0 0
    %v651 = vpop.f32.mrb[0].mxu0
    %v652 = vadd.f32 0.0, %v651
    %v653 = vpop.f32.mrb[0].mxu0
    %v654 = vpop.f32.mrb[0].mxu0
    %v655 = vpop.f32.mrb[0].mxu0
    %656 = vdwg.mxu0
    %v657 = vadd.f32 %v306, %v611
    %v658 = vmul.f32 %v657, 0.5
    %v659 = vtanh.pop %v658
    %v660 = vmul.f32 %v659, 0.5
    %v661 = vadd.f32 %v660, 0.5
    %v662 = vadd.f32 %v308, %v613
    %v663 = vmul.f32 %v662, 0.5
    %v664 = vtanh.pop %v663
    %v665 = vmul.f32 %v664, 0.5
    %v666 = vadd.f32 %v665, 0.5
    %v667 = vadd.f32 %v652, %v446
    %v668 = vmul.f32 %v661, %v667
    %v669 = vadd.f32 %v379, %v668
    %v670 = vtanh.pop %v669
    %v671 = vsub.f32 1.0, %v666
    %v672 = vmul.f32 %v671, %v670
    %v673 = vmul.f32 %v666, 0.0
    %v674 = vadd.f32 %v672, %v673
    %v675 = vpack.c.bf16 %v674, %v674
    %676 = vmatprep.subr.bf16.mxu0 %v529
    %677 = vmatpush1.bf16.msra.mxu0 %v528
    %678 = vmatprep.subr.bf16.mxu0 %v532
    %679 = vmatpush1.bf16.msra.mxu0 %v531
    %680 = vmatprep.subr.bf16.mxu0 %v535
    %681 = vmatpush1.bf16.msra.mxu0 %v534
    %682 = vmatprep.subr.bf16.mxu0 %v538
    %683 = vmatpush1.bf16.msra.mxu0 %v537
    %684 = vmatprep.subr.bf16.mxu0 %v541
    %685 = vmatpush1.bf16.msra.mxu0 %v540
    %686 = vmatprep.subr.bf16.mxu0 %v544
    %687 = vmatpush1.bf16.msra.mxu0 %v543
    %688 = vmatprep.subr.bf16.mxu0 %v547
    %689 = vmatpush1.bf16.msra.mxu0 %v546
    %690 = vmatprep.subr.bf16.mxu0 %v550
    %691 = vmatpush1.bf16.msra.mxu0 %v549
    %692 = vmatprep.subr.bf16.mxu0 0
    %693 = vmatpush1.bf16.msra.mxu0 0
    %694 = vmatprep.subr.bf16.mxu0 0
    %695 = vmatpush1.bf16.msra.mxu0 0
    %696 = vmatprep.subr.bf16.mxu0 0
    %697 = vmatpush1.bf16.msra.mxu0 0
    %698 = vmatprep.subr.bf16.mxu0 0
    %699 = vmatpush1.bf16.msra.mxu0 0
    %700 = vmatprep.subr.bf16.mxu0 0
    %701 = vmatpush1.bf16.msra.mxu0 0
    %702 = vmatprep.subr.bf16.mxu0 0
    %703 = vmatpush1.bf16.msra.mxu0 0
    %704 = vmatprep.subr.bf16.mxu0 0
    %705 = vmatpush1.bf16.msra.mxu0 0
    %706 = vmatprep.subr.bf16.mxu0 0
    %707 = vmatpush1.bf16.msra.mxu0 0
    %708 = vmatprep.mubr.bf16.mxu0 0
    %709 = vmatmul.mubr.bf16.gmra.mrb[0].mxu0 %v675
    %v710 = vpop.f32.mrb[0].mxu0
    %v711 = vadd.f32 0.0, %v710
    %v712 = vpop.f32.mrb[0].mxu0
    %v713 = vadd.f32 0.0, %v712
    %v714 = vpop.f32.mrb[0].mxu0
    %v715 = vpop.f32.mrb[0].mxu0
    %716 = vdwg.mxu0
    %717 = vmatprep.subr.bf16.mxu0 0
    %718 = vmatpush1.bf16.msra.mxu0 %v530
    %719 = vmatprep.subr.bf16.mxu0 0
    %720 = vmatpush1.bf16.msra.mxu0 %v533
    %721 = vmatprep.subr.bf16.mxu0 0
    %722 = vmatpush1.bf16.msra.mxu0 %v536
    %723 = vmatprep.subr.bf16.mxu0 0
    %724 = vmatpush1.bf16.msra.mxu0 %v539
    %725 = vmatprep.subr.bf16.mxu0 0
    %726 = vmatpush1.bf16.msra.mxu0 %v542
    %727 = vmatprep.subr.bf16.mxu0 0
    %728 = vmatpush1.bf16.msra.mxu0 %v545
    %729 = vmatprep.subr.bf16.mxu0 0
    %730 = vmatpush1.bf16.msra.mxu0 %v548
    %731 = vmatprep.subr.bf16.mxu0 0
    %732 = vmatpush1.bf16.msra.mxu0 %v551
    %733 = vmatprep.subr.bf16.mxu0 0
    %734 = vmatpush1.bf16.msra.mxu0 0
    %735 = vmatprep.subr.bf16.mxu0 0
    %736 = vmatpush1.bf16.msra.mxu0 0
    %737 = vmatprep.subr.bf16.mxu0 0
    %738 = vmatpush1.bf16.msra.mxu0 0
    %739 = vmatprep.subr.bf16.mxu0 0
    %740 = vmatpush1.bf16.msra.mxu0 0
    %741 = vmatprep.subr.bf16.mxu0 0
    %742 = vmatpush1.bf16.msra.mxu0 0
    %743 = vmatprep.subr.bf16.mxu0 0
    %744 = vmatpush1.bf16.msra.mxu0 0
    %745 = vmatprep.subr.bf16.mxu0 0
    %746 = vmatpush1.bf16.msra.mxu0 0
    %747 = vmatprep.subr.bf16.mxu0 0
    %748 = vmatpush1.bf16.msra.mxu0 0
    %749 = vmatprep.mubr.bf16.mxu0 0
    %750 = vmatmul.mubr.bf16.gmra.mrb[0].mxu0 %v675
    %v751 = vpop.f32.mrb[0].mxu0
    %v752 = vadd.f32 0.0, %v751
    %v753 = vpop.f32.mrb[0].mxu0
    %v754 = vpop.f32.mrb[0].mxu0
    %v755 = vpop.f32.mrb[0].mxu0
    %756 = vdwg.mxu0
    %v757 = vadd.f32 %v310, %v711
    %v758 = vmul.f32 %v757, 0.5
    %v759 = vtanh.pop %v758
    %v760 = vmul.f32 %v759, 0.5
    %v761 = vadd.f32 %v760, 0.5
    %v762 = vadd.f32 %v312, %v713
    %v763 = vmul.f32 %v762, 0.5
    %v764 = vtanh.pop %v763
    %v765 = vmul.f32 %v764, 0.5
    %v766 = vadd.f32 %v765, 0.5
    %v767 = vadd.f32 %v752, %v446
    %v768 = vmul.f32 %v761, %v767
    %v769 = vadd.f32 %v382, %v768
    %v770 = vtanh.pop %v769
    %v771 = vsub.f32 1.0, %v766
    %v772 = vmul.f32 %v771, %v770
    %v773 = vmul.f32 %v766, %v674
    %v774 = vadd.f32 %v772, %v773
    %v775 = vpack.c.bf16 %v774, %v774
    %776 = vmatprep.subr.bf16.mxu0 %v529
    %777 = vmatpush1.bf16.msra.mxu0 %v528
    %778 = vmatprep.subr.bf16.mxu0 %v532
    %779 = vmatpush1.bf16.msra.mxu0 %v531
    %780 = vmatprep.subr.bf16.mxu0 %v535
    %781 = vmatpush1.bf16.msra.mxu0 %v534
    %782 = vmatprep.subr.bf16.mxu0 %v538
    %783 = vmatpush1.bf16.msra.mxu0 %v537
    %784 = vmatprep.subr.bf16.mxu0 %v541
    %785 = vmatpush1.bf16.msra.mxu0 %v540
    %786 = vmatprep.subr.bf16.mxu0 %v544
    %787 = vmatpush1.bf16.msra.mxu0 %v543
    %788 = vmatprep.subr.bf16.mxu0 %v547
    %789 = vmatpush1.bf16.msra.mxu0 %v546
    %790 = vmatprep.subr.bf16.mxu0 %v550
    %791 = vmatpush1.bf16.msra.mxu0 %v549
    %792 = vmatprep.subr.bf16.mxu0 0
    %793 = vmatpush1.bf16.msra.mxu0 0
    %794 = vmatprep.subr.bf16.mxu0 0
    %795 = vmatpush1.bf16.msra.mxu0 0
    %796 = vmatprep.subr.bf16.mxu0 0
    %797 = vmatpush1.bf16.msra.mxu0 0
    %798 = vmatprep.subr.bf16.mxu0 0
    %799 = vmatpush1.bf16.msra.mxu0 0
    %800 = vmatprep.subr.bf16.mxu0 0
    %801 = vmatpush1.bf16.msra.mxu0 0
    %802 = vmatprep.subr.bf16.mxu0 0
    %803 = vmatpush1.bf16.msra.mxu0 0
    %804 = vmatprep.subr.bf16.mxu0 0
    %805 = vmatpush1.bf16.msra.mxu0 0
    %806 = vmatprep.subr.bf16.mxu0 0
    %807 = vmatpush1.bf16.msra.mxu0 0
    %808 = vmatprep.mubr.bf16.mxu0 0
    %809 = vmatmul.mubr.bf16.gmra.mrb[0].mxu0 %v775
    %v810 = vpop.f32.mrb[0].mxu0
    %v811 = vadd.f32 0.0, %v810
    %v812 = vpop.f32.mrb[0].mxu0
    %v813 = vadd.f32 0.0, %v812
    %v814 = vpop.f32.mrb[0].mxu0
    %v815 = vpop.f32.mrb[0].mxu0
    %816 = vdwg.mxu0
    %817 = vmatprep.subr.bf16.mxu0 0
    %818 = vmatpush1.bf16.msra.mxu0 %v530
    %819 = vmatprep.subr.bf16.mxu0 0
    %820 = vmatpush1.bf16.msra.mxu0 %v533
    %821 = vmatprep.subr.bf16.mxu0 0
    %822 = vmatpush1.bf16.msra.mxu0 %v536
    %823 = vmatprep.subr.bf16.mxu0 0
    %824 = vmatpush1.bf16.msra.mxu0 %v539
    %825 = vmatprep.subr.bf16.mxu0 0
    %826 = vmatpush1.bf16.msra.mxu0 %v542
    %827 = vmatprep.subr.bf16.mxu0 0
    %828 = vmatpush1.bf16.msra.mxu0 %v545
    %829 = vmatprep.subr.bf16.mxu0 0
    %830 = vmatpush1.bf16.msra.mxu0 %v548
    %831 = vmatprep.subr.bf16.mxu0 0
    %832 = vmatpush1.bf16.msra.mxu0 %v551
    %833 = vmatprep.subr.bf16.mxu0 0
    %834 = vmatpush1.bf16.msra.mxu0 0
    %835 = vmatprep.subr.bf16.mxu0 0
    %836 = vmatpush1.bf16.msra.mxu0 0
    %837 = vmatprep.subr.bf16.mxu0 0
    %838 = vmatpush1.bf16.msra.mxu0 0
    %839 = vmatprep.subr.bf16.mxu0 0
    %840 = vmatpush1.bf16.msra.mxu0 0
    %841 = vmatprep.subr.bf16.mxu0 0
    %842 = vmatpush1.bf16.msra.mxu0 0
    %843 = vmatprep.subr.bf16.mxu0 0
    %844 = vmatpush1.bf16.msra.mxu0 0
    %845 = vmatprep.subr.bf16.mxu0 0
    %846 = vmatpush1.bf16.msra.mxu0 0
    %847 = vmatprep.subr.bf16.mxu0 0
    %848 = vmatpush1.bf16.msra.mxu0 0
    %849 = vmatprep.mubr.bf16.mxu0 0
    %850 = vmatmul.mubr.bf16.gmra.mrb[0].mxu0 %v775
    %v851 = vpop.f32.mrb[0].mxu0
    %v852 = vadd.f32 0.0, %v851
    %v853 = vpop.f32.mrb[0].mxu0
    %v854 = vpop.f32.mrb[0].mxu0
    %v855 = vpop.f32.mrb[0].mxu0
    %856 = vdwg.mxu0
    %v857 = vadd.f32 %v316, %v811
    %v858 = vmul.f32 %v857, 0.5
    %v859 = vtanh.pop %v858
    %v860 = vmul.f32 %v859, 0.5
    %v861 = vadd.f32 %v860, 0.5
    %v862 = vadd.f32 %v318, %v813
    %v863 = vmul.f32 %v862, 0.5
    %v864 = vtanh.pop %v863
    %v865 = vmul.f32 %v864, 0.5
    %v866 = vadd.f32 %v865, 0.5
    %v867 = vadd.f32 %v852, %v446
    %v868 = vmul.f32 %v861, %v867
    %v869 = vadd.f32 %v387, %v868
    %v870 = vtanh.pop %v869
    %v871 = vsub.f32 1.0, %v866
    %v872 = vmul.f32 %v871, %v870
    %v873 = vmul.f32 %v866, %v774
    %v874 = vadd.f32 %v872, %v873
    %v875 = vpack.c.bf16 %v874, %v874
    %876 = vmatprep.subr.bf16.mxu0 %v529
    %877 = vmatpush1.bf16.msra.mxu0 %v528
    %878 = vmatprep.subr.bf16.mxu0 %v532
    %879 = vmatpush1.bf16.msra.mxu0 %v531
    %880 = vmatprep.subr.bf16.mxu0 %v535
    %881 = vmatpush1.bf16.msra.mxu0 %v534
    %882 = vmatprep.subr.bf16.mxu0 %v538
    %883 = vmatpush1.bf16.msra.mxu0 %v537
    %884 = vmatprep.subr.bf16.mxu0 %v541
    %885 = vmatpush1.bf16.msra.mxu0 %v540
    %886 = vmatprep.subr.bf16.mxu0 %v544
    %887 = vmatpush1.bf16.msra.mxu0 %v543
    %888 = vmatprep.subr.bf16.mxu0 %v547
    %889 = vmatpush1.bf16.msra.mxu0 %v546
    %890 = vmatprep.subr.bf16.mxu0 %v550
    %891 = vmatpush1.bf16.msra.mxu0 %v549
    %892 = vmatprep.subr.bf16.mxu0 0
    %893 = vmatpush1.bf16.msra.mxu0 0
    %894 = vmatprep.subr.bf16.mxu0 0
    %895 = vmatpush1.bf16.msra.mxu0 0
    %896 = vmatprep.subr.bf16.mxu0 0
    %897 = vmatpush1.bf16.msra.mxu0 0
    %898 = vmatprep.subr.bf16.mxu0 0
    %899 = vmatpush1.bf16.msra.mxu0 0
    %900 = vmatprep.subr.bf16.mxu0 0
    %901 = vmatpush1.bf16.msra.mxu0 0
    %902 = vmatprep.subr.bf16.mxu0 0
    %903 = vmatpush1.bf16.msra.mxu0 0
    %904 = vmatprep.subr.bf16.mxu0 0
    %905 = vmatpush1.bf16.msra.mxu0 0
    %906 = vmatprep.subr.bf16.mxu0 0
    %907 = vmatpush1.bf16.msra.mxu0 0
    %908 = vmatprep.mubr.bf16.mxu0 0
    %909 = vmatmul.mubr.bf16.gmra.mrb[0].mxu0 %v875
    %v910 = vpop.f32.mrb[0].mxu0
    %v911 = vadd.f32 0.0, %v910
    %v912 = vpop.f32.mrb[0].mxu0
    %v913 = vadd.f32 0.0, %v912
    %v914 = vpop.f32.mrb[0].mxu0
    %v915 = vpop.f32.mrb[0].mxu0
    %916 = vdwg.mxu0
    %917 = vmatprep.subr.bf16.mxu0 0
    %918 = vmatpush1.bf16.msra.mxu0 %v530
    %919 = vmatprep.subr.bf16.mxu0 0
    %920 = vmatpush1.bf16.msra.mxu0 %v533
    %921 = vmatprep.subr.bf16.mxu0 0
    %922 = vmatpush1.bf16.msra.mxu0 %v536
    %923 = vmatprep.subr.bf16.mxu0 0
    %924 = vmatpush1.bf16.msra.mxu0 %v539
    %925 = vmatprep.subr.bf16.mxu0 0
    %926 = vmatpush1.bf16.msra.mxu0 %v542
    %927 = vmatprep.subr.bf16.mxu0 0
    %928 = vmatpush1.bf16.msra.mxu0 %v545
    %929 = vmatprep.subr.bf16.mxu0 0
    %930 = vmatpush1.bf16.msra.mxu0 %v548
    %931 = vmatprep.subr.bf16.mxu0 0
    %932 = vmatpush1.bf16.msra.mxu0 %v551
    %933 = vmatprep.subr.bf16.mxu0 0
    %934 = vmatpush1.bf16.msra.mxu0 0
    %935 = vmatprep.subr.bf16.mxu0 0
    %936 = vmatpush1.bf16.msra.mxu0 0
    %937 = vmatprep.subr.bf16.mxu0 0
    %938 = vmatpush1.bf16.msra.mxu0 0
    %939 = vmatprep.subr.bf16.mxu0 0
    %940 = vmatpush1.bf16.msra.mxu0 0
    %941 = vmatprep.subr.bf16.mxu0 0
    %942 = vmatpush1.bf16.msra.mxu0 0
    %943 = vmatprep.subr.bf16.mxu0 0
    %944 = vmatpush1.bf16.msra.mxu0 0
    %945 = vmatprep.subr.bf16.mxu0 0
    %946 = vmatpush1.bf16.msra.mxu0 0
    %947 = vmatprep.subr.bf16.mxu0 0
    %948 = vmatpush1.bf16.msra.mxu0 0
    %949 = vmatprep.mubr.bf16.mxu0 0
    %950 = vmatmul.mubr.bf16.gmra.mrb[0].mxu0 %v875
    %v951 = vpop.f32.mrb[0].mxu0
    %v952 = vadd.f32 0.0, %v951
    %v953 = vpop.f32.mrb[0].mxu0
    %v954 = vpop.f32.mrb[0].mxu0
    %v955 = vpop.f32.mrb[0].mxu0
    %956 = vdwg.mxu0
    %v957 = vadd.f32 %v320, %v911
    %v958 = vmul.f32 %v957, 0.5
    %v959 = vtanh.pop %v958
    %v960 = vmul.f32 %v959, 0.5
    %v961 = vadd.f32 %v960, 0.5
    %v962 = vadd.f32 %v322, %v913
    %v963 = vmul.f32 %v962, 0.5
    %v964 = vtanh.pop %v963
    %v965 = vmul.f32 %v964, 0.5
    %v966 = vadd.f32 %v965, 0.5
    %v967 = vadd.f32 %v952, %v446
    %v968 = vmul.f32 %v961, %v967
    %v969 = vadd.f32 %v390, %v968
    %v970 = vtanh.pop %v969
    %v971 = vsub.f32 1.0, %v966
    %v972 = vmul.f32 %v971, %v970
    %v973 = vmul.f32 %v966, %v874
    %v974 = vadd.f32 %v972, %v973
    %v975 = vpack.c.bf16 %v974, %v974
    %976 = vmatprep.subr.bf16.mxu0 %v529
    %977 = vmatpush1.bf16.msra.mxu0 %v528
    %978 = vmatprep.subr.bf16.mxu0 %v532
    %979 = vmatpush1.bf16.msra.mxu0 %v531
    %980 = vmatprep.subr.bf16.mxu0 %v535
    %981 = vmatpush1.bf16.msra.mxu0 %v534
    %982 = vmatprep.subr.bf16.mxu0 %v538
    %983 = vmatpush1.bf16.msra.mxu0 %v537
    %984 = vmatprep.subr.bf16.mxu0 %v541
    %985 = vmatpush1.bf16.msra.mxu0 %v540
    %986 = vmatprep.subr.bf16.mxu0 %v544
    %987 = vmatpush1.bf16.msra.mxu0 %v543
    %988 = vmatprep.subr.bf16.mxu0 %v547
    %989 = vmatpush1.bf16.msra.mxu0 %v546
    %990 = vmatprep.subr.bf16.mxu0 %v550
    %991 = vmatpush1.bf16.msra.mxu0 %v549
    %992 = vmatprep.subr.bf16.mxu0 0
    %993 = vmatpush1.bf16.msra.mxu0 0
    %994 = vmatprep.subr.bf16.mxu0 0
    %995 = vmatpush1.bf16.msra.mxu0 0
    %996 = vmatprep.subr.bf16.mxu0 0
    %997 = vmatpush1.bf16.msra.mxu0 0
    %998 = vmatprep.subr.bf16.mxu0 0
    %999 = vmatpush1.bf16.msra.mxu0 0
    %1000 = vmatprep.subr.bf16.mxu0 0
    %1001 = vmatpush1.bf16.msra.mxu0 0
    %1002 = vmatprep.subr.bf16.mxu0 0
    %1003 = vmatpush1.bf16.msra.mxu0 0
    %1004 = vmatprep.subr.bf16.mxu0 0
    %1005 = vmatpush1.bf16.msra.mxu0 0
    %1006 = vmatprep.subr.bf16.mxu0 0
    %1007 = vmatpush1.bf16.msra.mxu0 0
    %1008 = vmatprep.mubr.bf16.mxu0 0
    %1009 = vmatmul.mubr.bf16.gmra.mrb[0].mxu0 %v975
    %v1010 = vpop.f32.mrb[0].mxu0
    %v1011 = vadd.f32 0.0, %v1010
    %v1012 = vpop.f32.mrb[0].mxu0
    %v1013 = vadd.f32 0.0, %v1012
    %v1014 = vpop.f32.mrb[0].mxu0
    %v1015 = vpop.f32.mrb[0].mxu0
    %1016 = vdwg.mxu0
    %1017 = vmatprep.subr.bf16.mxu0 0
    %1018 = vmatpush1.bf16.msra.mxu0 %v530
    %1019 = vmatprep.subr.bf16.mxu0 0
    %1020 = vmatpush1.bf16.msra.mxu0 %v533
    %1021 = vmatprep.subr.bf16.mxu0 0
    %1022 = vmatpush1.bf16.msra.mxu0 %v536
    %1023 = vmatprep.subr.bf16.mxu0 0
    %1024 = vmatpush1.bf16.msra.mxu0 %v539
    %1025 = vmatprep.subr.bf16.mxu0 0
    %1026 = vmatpush1.bf16.msra.mxu0 %v542
    %1027 = vmatprep.subr.bf16.mxu0 0
    %1028 = vmatpush1.bf16.msra.mxu0 %v545
    %1029 = vmatprep.subr.bf16.mxu0 0
    %1030 = vmatpush1.bf16.msra.mxu0 %v548
    %1031 = vmatprep.subr.bf16.mxu0 0
    %1032 = vmatpush1.bf16.msra.mxu0 %v551
    %1033 = vmatprep.subr.bf16.mxu0 0
    %1034 = vmatpush1.bf16.msra.mxu0 0
    %1035 = vmatprep.subr.bf16.mxu0 0
    %1036 = vmatpush1.bf16.msra.mxu0 0
    %1037 = vmatprep.subr.bf16.mxu0 0
    %1038 = vmatpush1.bf16.msra.mxu0 0
    %1039 = vmatprep.subr.bf16.mxu0 0
    %1040 = vmatpush1.bf16.msra.mxu0 0
    %1041 = vmatprep.subr.bf16.mxu0 0
    %1042 = vmatpush1.bf16.msra.mxu0 0
    %1043 = vmatprep.subr.bf16.mxu0 0
    %1044 = vmatpush1.bf16.msra.mxu0 0
    %1045 = vmatprep.subr.bf16.mxu0 0
    %1046 = vmatpush1.bf16.msra.mxu0 0
    %1047 = vmatprep.subr.bf16.mxu0 0
    %1048 = vmatpush1.bf16.msra.mxu0 0
    %1049 = vmatprep.mubr.bf16.mxu0 0
    %1050 = vmatmul.mubr.bf16.gmra.mrb[0].mxu0 %v975
    %v1051 = vpop.f32.mrb[0].mxu0
    %v1052 = vadd.f32 0.0, %v1051
    %v1053 = vpop.f32.mrb[0].mxu0
    %v1054 = vpop.f32.mrb[0].mxu0
    %v1055 = vpop.f32.mrb[0].mxu0
    %1056 = vdwg.mxu0
    %v1057 = vadd.f32 %v326, %v1011
    %v1058 = vmul.f32 %v1057, 0.5
    %v1059 = vtanh.pop %v1058
    %v1060 = vmul.f32 %v1059, 0.5
    %v1061 = vadd.f32 %v1060, 0.5
    %v1062 = vadd.f32 %v328, %v1013
    %v1063 = vmul.f32 %v1062, 0.5
    %v1064 = vtanh.pop %v1063
    %v1065 = vmul.f32 %v1064, 0.5
    %v1066 = vadd.f32 %v1065, 0.5
    %v1067 = vadd.f32 %v1052, %v446
    %v1068 = vmul.f32 %v1061, %v1067
    %v1069 = vadd.f32 %v395, %v1068
    %v1070 = vtanh.pop %v1069
    %v1071 = vsub.f32 1.0, %v1066
    %v1072 = vmul.f32 %v1071, %v1070
    %v1073 = vmul.f32 %v1066, %v974
    %v1074 = vadd.f32 %v1072, %v1073
    %v1075 = vpack.c.bf16 %v1074, %v1074
    %1076 = vmatprep.subr.bf16.mxu0 %v529
    %1077 = vmatpush1.bf16.msra.mxu0 %v528
    %1078 = vmatprep.subr.bf16.mxu0 %v532
    %1079 = vmatpush1.bf16.msra.mxu0 %v531
    %1080 = vmatprep.subr.bf16.mxu0 %v535
    %1081 = vmatpush1.bf16.msra.mxu0 %v534
    %1082 = vmatprep.subr.bf16.mxu0 %v538
    %1083 = vmatpush1.bf16.msra.mxu0 %v537
    %1084 = vmatprep.subr.bf16.mxu0 %v541
    %1085 = vmatpush1.bf16.msra.mxu0 %v540
    %1086 = vmatprep.subr.bf16.mxu0 %v544
    %1087 = vmatpush1.bf16.msra.mxu0 %v543
    %1088 = vmatprep.subr.bf16.mxu0 %v547
    %1089 = vmatpush1.bf16.msra.mxu0 %v546
    %1090 = vmatprep.subr.bf16.mxu0 %v550
    %1091 = vmatpush1.bf16.msra.mxu0 %v549
    %1092 = vmatprep.subr.bf16.mxu0 0
    %1093 = vmatpush1.bf16.msra.mxu0 0
    %1094 = vmatprep.subr.bf16.mxu0 0
    %1095 = vmatpush1.bf16.msra.mxu0 0
    %1096 = vmatprep.subr.bf16.mxu0 0
    %1097 = vmatpush1.bf16.msra.mxu0 0
    %1098 = vmatprep.subr.bf16.mxu0 0
    %1099 = vmatpush1.bf16.msra.mxu0 0
    %1100 = vmatprep.subr.bf16.mxu0 0
    %1101 = vmatpush1.bf16.msra.mxu0 0
    %1102 = vmatprep.subr.bf16.mxu0 0
    %1103 = vmatpush1.bf16.msra.mxu0 0
    %1104 = vmatprep.subr.bf16.mxu0 0
    %1105 = vmatpush1.bf16.msra.mxu0 0
    %1106 = vmatprep.subr.bf16.mxu0 0
    %1107 = vmatpush1.bf16.msra.mxu0 0
    %1108 = vmatprep.mubr.bf16.mxu0 0
    %1109 = vmatmul.mubr.bf16.gmra.mrb[0].mxu0 %v1075
    %v1110 = vpop.f32.mrb[0].mxu0
    %v1111 = vadd.f32 0.0, %v1110
    %v1112 = vpop.f32.mrb[0].mxu0
    %v1113 = vadd.f32 0.0, %v1112
    %v1114 = vpop.f32.mrb[0].mxu0
    %v1115 = vpop.f32.mrb[0].mxu0
    %1116 = vdwg.mxu0
    %1117 = vmatprep.subr.bf16.mxu0 0
    %1118 = vmatpush1.bf16.msra.mxu0 %v530
    %1119 = vmatprep.subr.bf16.mxu0 0
    %1120 = vmatpush1.bf16.msra.mxu0 %v533
    %1121 = vmatprep.subr.bf16.mxu0 0
    %1122 = vmatpush1.bf16.msra.mxu0 %v536
    %1123 = vmatprep.subr.bf16.mxu0 0
    %1124 = vmatpush1.bf16.msra.mxu0 %v539
    %1125 = vmatprep.subr.bf16.mxu0 0
    %1126 = vmatpush1.bf16.msra.mxu0 %v542
    %1127 = vmatprep.subr.bf16.mxu0 0
    %1128 = vmatpush1.bf16.msra.mxu0 %v545
    %1129 = vmatprep.subr.bf16.mxu0 0
    %1130 = vmatpush1.bf16.msra.mxu0 %v548
    %1131 = vmatprep.subr.bf16.mxu0 0
    %1132 = vmatpush1.bf16.msra.mxu0 %v551
    %1133 = vmatprep.subr.bf16.mxu0 0
    %1134 = vmatpush1.bf16.msra.mxu0 0
    %1135 = vmatprep.subr.bf16.mxu0 0
    %1136 = vmatpush1.bf16.msra.mxu0 0
    %1137 = vmatprep.subr.bf16.mxu0 0
    %1138 = vmatpush1.bf16.msra.mxu0 0
    %1139 = vmatprep.subr.bf16.mxu0 0
    %1140 = vmatpush1.bf16.msra.mxu0 0
    %1141 = vmatprep.subr.bf16.mxu0 0
    %1142 = vmatpush1.bf16.msra.mxu0 0
    %1143 = vmatprep.subr.bf16.mxu0 0
    %1144 = vmatpush1.bf16.msra.mxu0 0
    %1145 = vmatprep.subr.bf16.mxu0 0
    %1146 = vmatpush1.bf16.msra.mxu0 0
    %1147 = vmatprep.subr.bf16.mxu0 0
    %1148 = vmatpush1.bf16.msra.mxu0 0
    %1149 = vmatprep.mubr.bf16.mxu0 0
    %1150 = vmatmul.mubr.bf16.gmra.mrb[0].mxu0 %v1075
    %v1151 = vpop.f32.mrb[0].mxu0
    %v1152 = vadd.f32 0.0, %v1151
    %v1153 = vpop.f32.mrb[0].mxu0
    %v1154 = vpop.f32.mrb[0].mxu0
    %v1155 = vpop.f32.mrb[0].mxu0
    %1156 = vdwg.mxu0
    %v1157 = vadd.f32 %v330, %v1111
    %v1158 = vmul.f32 %v1157, 0.5
    %v1159 = vtanh.pop %v1158
    %v1160 = vmul.f32 %v1159, 0.5
    %v1161 = vadd.f32 %v1160, 0.5
    %v1162 = vadd.f32 %v332, %v1113
    %v1163 = vmul.f32 %v1162, 0.5
    %v1164 = vtanh.pop %v1163
    %v1165 = vmul.f32 %v1164, 0.5
    %v1166 = vadd.f32 %v1165, 0.5
    %v1167 = vadd.f32 %v1152, %v446
    %v1168 = vmul.f32 %v1161, %v1167
    %v1169 = vadd.f32 %v398, %v1168
    %v1170 = vtanh.pop %v1169
    %v1171 = vsub.f32 1.0, %v1166
    %v1172 = vmul.f32 %v1171, %v1170
    %v1173 = vmul.f32 %v1166, %v1074
    %v1174 = vadd.f32 %v1172, %v1173
    %v1175 = vpack.c.bf16 %v1174, %v1174
    %1176 = vmatprep.subr.bf16.mxu0 %v529
    %1177 = vmatpush1.bf16.msra.mxu0 %v528
    %1178 = vmatprep.subr.bf16.mxu0 %v532
    %1179 = vmatpush1.bf16.msra.mxu0 %v531
    %1180 = vmatprep.subr.bf16.mxu0 %v535
    %1181 = vmatpush1.bf16.msra.mxu0 %v534
    %1182 = vmatprep.subr.bf16.mxu0 %v538
    %1183 = vmatpush1.bf16.msra.mxu0 %v537
    %1184 = vmatprep.subr.bf16.mxu0 %v541
    %1185 = vmatpush1.bf16.msra.mxu0 %v540
    %1186 = vmatprep.subr.bf16.mxu0 %v544
    %1187 = vmatpush1.bf16.msra.mxu0 %v543
    %1188 = vmatprep.subr.bf16.mxu0 %v547
    %1189 = vmatpush1.bf16.msra.mxu0 %v546
    %1190 = vmatprep.subr.bf16.mxu0 %v550
    %1191 = vmatpush1.bf16.msra.mxu0 %v549
    %1192 = vmatprep.subr.bf16.mxu0 0
    %1193 = vmatpush1.bf16.msra.mxu0 0
    %1194 = vmatprep.subr.bf16.mxu0 0
    %1195 = vmatpush1.bf16.msra.mxu0 0
    %1196 = vmatprep.subr.bf16.mxu0 0
    %1197 = vmatpush1.bf16.msra.mxu0 0
    %1198 = vmatprep.subr.bf16.mxu0 0
    %1199 = vmatpush1.bf16.msra.mxu0 0
    %1200 = vmatprep.subr.bf16.mxu0 0
    %1201 = vmatpush1.bf16.msra.mxu0 0
    %1202 = vmatprep.subr.bf16.mxu0 0
    %1203 = vmatpush1.bf16.msra.mxu0 0
    %1204 = vmatprep.subr.bf16.mxu0 0
    %1205 = vmatpush1.bf16.msra.mxu0 0
    %1206 = vmatprep.subr.bf16.mxu0 0
    %1207 = vmatpush1.bf16.msra.mxu0 0
    %1208 = vmatprep.mubr.bf16.mxu0 0
    %1209 = vmatmul.mubr.bf16.gmra.mrb[0].mxu0 %v1175
    %v1210 = vpop.f32.mrb[0].mxu0
    %v1211 = vadd.f32 0.0, %v1210
    %v1212 = vpop.f32.mrb[0].mxu0
    %v1213 = vadd.f32 0.0, %v1212
    %v1214 = vpop.f32.mrb[0].mxu0
    %v1215 = vpop.f32.mrb[0].mxu0
    %1216 = vdwg.mxu0
    %1217 = vmatprep.subr.bf16.mxu0 0
    %1218 = vmatpush1.bf16.msra.mxu0 %v530
    %1219 = vmatprep.subr.bf16.mxu0 0
    %1220 = vmatpush1.bf16.msra.mxu0 %v533
    %1221 = vmatprep.subr.bf16.mxu0 0
    %1222 = vmatpush1.bf16.msra.mxu0 %v536
    %1223 = vmatprep.subr.bf16.mxu0 0
    %1224 = vmatpush1.bf16.msra.mxu0 %v539
    %1225 = vmatprep.subr.bf16.mxu0 0
    %1226 = vmatpush1.bf16.msra.mxu0 %v542
    %1227 = vmatprep.subr.bf16.mxu0 0
    %1228 = vmatpush1.bf16.msra.mxu0 %v545
    %1229 = vmatprep.subr.bf16.mxu0 0
    %1230 = vmatpush1.bf16.msra.mxu0 %v548
    %1231 = vmatprep.subr.bf16.mxu0 0
    %1232 = vmatpush1.bf16.msra.mxu0 %v551
    %1233 = vmatprep.subr.bf16.mxu0 0
    %1234 = vmatpush1.bf16.msra.mxu0 0
    %1235 = vmatprep.subr.bf16.mxu0 0
    %1236 = vmatpush1.bf16.msra.mxu0 0
    %1237 = vmatprep.subr.bf16.mxu0 0
    %1238 = vmatpush1.bf16.msra.mxu0 0
    %1239 = vmatprep.subr.bf16.mxu0 0
    %1240 = vmatpush1.bf16.msra.mxu0 0
    %1241 = vmatprep.subr.bf16.mxu0 0
    %1242 = vmatpush1.bf16.msra.mxu0 0
    %1243 = vmatprep.subr.bf16.mxu0 0
    %1244 = vmatpush1.bf16.msra.mxu0 0
    %1245 = vmatprep.subr.bf16.mxu0 0
    %1246 = vmatpush1.bf16.msra.mxu0 0
    %1247 = vmatprep.subr.bf16.mxu0 0
    %1248 = vmatpush1.bf16.msra.mxu0 0
    %1249 = vmatprep.mubr.bf16.mxu0 0
    %1250 = vmatmul.mubr.bf16.gmra.mrb[0].mxu0 %v1175
    %v1251 = vpop.f32.mrb[0].mxu0
    %v1252 = vadd.f32 0.0, %v1251
    %v1253 = vpop.f32.mrb[0].mxu0
    %v1254 = vpop.f32.mrb[0].mxu0
    %v1255 = vpop.f32.mrb[0].mxu0
    %1256 = vdwg.mxu0
    %v1257 = vadd.f32 %v336, %v1211
    %v1258 = vmul.f32 %v1257, 0.5
    %v1259 = vtanh.pop %v1258
    %v1260 = vmul.f32 %v1259, 0.5
    %v1261 = vadd.f32 %v1260, 0.5
    %v1262 = vadd.f32 %v338, %v1213
    %v1263 = vmul.f32 %v1262, 0.5
    %v1264 = vtanh.pop %v1263
    %v1265 = vmul.f32 %v1264, 0.5
    %v1266 = vadd.f32 %v1265, 0.5
    %v1267 = vadd.f32 %v1252, %v446
    %v1268 = vmul.f32 %v1261, %v1267
    %v1269 = vadd.f32 %v403, %v1268
    %v1270 = vtanh.pop %v1269
    %v1271 = vsub.f32 1.0, %v1266
    %v1272 = vmul.f32 %v1271, %v1270
    %v1273 = vmul.f32 %v1266, %v1174
    %v1274 = vadd.f32 %v1272, %v1273
    %v1275 = vpack.c.bf16 %v1274, %v1274
    %1276 = vmatprep.subr.bf16.mxu0 %v529
    %1277 = vmatpush1.bf16.msra.mxu0 %v528
    %1278 = vmatprep.subr.bf16.mxu0 %v532
    %1279 = vmatpush1.bf16.msra.mxu0 %v531
    %1280 = vmatprep.subr.bf16.mxu0 %v535
    %1281 = vmatpush1.bf16.msra.mxu0 %v534
    %1282 = vmatprep.subr.bf16.mxu0 %v538
    %1283 = vmatpush1.bf16.msra.mxu0 %v537
    %1284 = vmatprep.subr.bf16.mxu0 %v541
    %1285 = vmatpush1.bf16.msra.mxu0 %v540
    %1286 = vmatprep.subr.bf16.mxu0 %v544
    %1287 = vmatpush1.bf16.msra.mxu0 %v543
    %1288 = vmatprep.subr.bf16.mxu0 %v547
    %1289 = vmatpush1.bf16.msra.mxu0 %v546
    %1290 = vmatprep.subr.bf16.mxu0 %v550
    %1291 = vmatpush1.bf16.msra.mxu0 %v549
    %1292 = vmatprep.subr.bf16.mxu0 0
    %1293 = vmatpush1.bf16.msra.mxu0 0
    %1294 = vmatprep.subr.bf16.mxu0 0
    %1295 = vmatpush1.bf16.msra.mxu0 0
    %1296 = vmatprep.subr.bf16.mxu0 0
    %1297 = vmatpush1.bf16.msra.mxu0 0
    %1298 = vmatprep.subr.bf16.mxu0 0
    %1299 = vmatpush1.bf16.msra.mxu0 0
    %1300 = vmatprep.subr.bf16.mxu0 0
    %1301 = vmatpush1.bf16.msra.mxu0 0
    %1302 = vmatprep.subr.bf16.mxu0 0
    %1303 = vmatpush1.bf16.msra.mxu0 0
    %1304 = vmatprep.subr.bf16.mxu0 0
    %1305 = vmatpush1.bf16.msra.mxu0 0
    %1306 = vmatprep.subr.bf16.mxu0 0
    %1307 = vmatpush1.bf16.msra.mxu0 0
    %1308 = vmatprep.mubr.bf16.mxu0 0
    %1309 = vmatmul.mubr.bf16.gmra.mrb[0].mxu0 %v1275
    %v1310 = vpop.f32.mrb[0].mxu0
    %v1311 = vadd.f32 0.0, %v1310
    %v1312 = vpop.f32.mrb[0].mxu0
    %v1313 = vadd.f32 0.0, %v1312
    %v1314 = vpop.f32.mrb[0].mxu0
    %v1315 = vpop.f32.mrb[0].mxu0
    %1316 = vdwg.mxu0
    %1317 = vmatprep.subr.bf16.mxu0 0
    %1318 = vmatpush1.bf16.msra.mxu0 %v530
    %1319 = vmatprep.subr.bf16.mxu0 0
    %1320 = vmatpush1.bf16.msra.mxu0 %v533
    %1321 = vmatprep.subr.bf16.mxu0 0
    %1322 = vmatpush1.bf16.msra.mxu0 %v536
    %1323 = vmatprep.subr.bf16.mxu0 0
    %1324 = vmatpush1.bf16.msra.mxu0 %v539
    %1325 = vmatprep.subr.bf16.mxu0 0
    %1326 = vmatpush1.bf16.msra.mxu0 %v542
    %1327 = vmatprep.subr.bf16.mxu0 0
    %1328 = vmatpush1.bf16.msra.mxu0 %v545
    %1329 = vmatprep.subr.bf16.mxu0 0
    %1330 = vmatpush1.bf16.msra.mxu0 %v548
    %1331 = vmatprep.subr.bf16.mxu0 0
    %1332 = vmatpush1.bf16.msra.mxu0 %v551
    %1333 = vmatprep.subr.bf16.mxu0 0
    %1334 = vmatpush1.bf16.msra.mxu0 0
    %1335 = vmatprep.subr.bf16.mxu0 0
    %1336 = vmatpush1.bf16.msra.mxu0 0
    %1337 = vmatprep.subr.bf16.mxu0 0
    %1338 = vmatpush1.bf16.msra.mxu0 0
    %1339 = vmatprep.subr.bf16.mxu0 0
    %1340 = vmatpush1.bf16.msra.mxu0 0
    %1341 = vmatprep.subr.bf16.mxu0 0
    %1342 = vmatpush1.bf16.msra.mxu0 0
    %1343 = vmatprep.subr.bf16.mxu0 0
    %1344 = vmatpush1.bf16.msra.mxu0 0
    %1345 = vmatprep.subr.bf16.mxu0 0
    %1346 = vmatpush1.bf16.msra.mxu0 0
    %1347 = vmatprep.subr.bf16.mxu0 0
    %1348 = vmatpush1.bf16.msra.mxu0 0
    %1349 = vmatprep.mubr.bf16.mxu0 0
    %1350 = vmatmul.mubr.bf16.gmra.mrb[0].mxu0 %v1275
    %v1351 = vpop.f32.mrb[0].mxu0
    %v1352 = vadd.f32 0.0, %v1351
    %v1353 = vpop.f32.mrb[0].mxu0
    %v1354 = vpop.f32.mrb[0].mxu0
    %v1355 = vpop.f32.mrb[0].mxu0
    %1356 = vdwg.mxu0
    %v1357 = vadd.f32 %v340, %v1311
    %v1358 = vmul.f32 %v1357, 0.5
    %v1359 = vtanh.pop %v1358
    %v1360 = vmul.f32 %v1359, 0.5
    %v1361 = vadd.f32 %v1360, 0.5
    %v1362 = vadd.f32 %v342, %v1313
    %v1363 = vmul.f32 %v1362, 0.5
    %v1364 = vtanh.pop %v1363
    %v1365 = vmul.f32 %v1364, 0.5
    %v1366 = vadd.f32 %v1365, 0.5
    %v1367 = vadd.f32 %v1352, %v446
    %v1368 = vmul.f32 %v1361, %v1367
    %v1369 = vadd.f32 %v406, %v1368
    %v1370 = vtanh.pop %v1369
    %v1371 = vsub.f32 1.0, %v1366
    %v1372 = vmul.f32 %v1371, %v1370
    %v1373 = vmul.f32 %v1366, %v1274
    %v1374 = vadd.f32 %v1372, %v1373
    %1375 = vst.msk [vmem:[#allocation2] sm:$0xff] %vm47, %v1374
    // Predicated region
    $region30: #{feature_extractor.1} parent=1 // pred_check
      _
    $region31: #{feature_extractor.1} parent=1 // pred_check_branch
      %1377 = sbr.rel (0) target = $region33
    $region32: #{feature_extractor.1} parent=1 // pred_region
      %s1379 = ssub.s32 128, 128
      %1380 = vsyncadd [#allocation3], %s1379
      %s1382 = sshll.u32 [#allocation2], 4
      %s1383 = int_to_ptr.vmem [resolvable:$true] %s1382
      %1385 = dma.vmem_to_hbm [thread:$0]  %s1383, 128, %s7, [#allocation3]
    $region33: #{feature_extractor.1} parent=1 // pred_fallthru
      _
    // Predicated region
    $region34: #{feature_extractor.1} parent=1 // pred_check
      _
    $region35: #{feature_extractor.1} parent=1 // pred_check_branch
      %1387 = sbr.rel (0) target = $region37
    $region36: #{feature_extractor.1} parent=1 // pred_region
      %1388 = dma.done [#allocation3], 128
    $region37: #{feature_extractor.1} parent=1 // pred_fallthru
      _
    %1389 = vsyncpa [#allocation3], 1

</llo_original>
